<compile_context>
chip_gen: v7x
topology: tpu7x:2x2x1
jax: 0.10.0
libtpu: 0.0.40
codegen_flags: <defaults>
</compile_context>

<pallas_src>
import functools

import jax
import jax.numpy as jnp
from jax.experimental import pallas as pl
from jax.experimental.pallas import tpu as pltpu


def _round_up(n, m):
    return ((n + m - 1) // m) * m


# --------------------------------------------------------------------------- #
# Kernel
# --------------------------------------------------------------------------- #
def autoencoder_kernel(x_ref,
                       w1_ref, b1_ref,
                       w2_ref, b2_ref,
                       w34_ref, b34_ref,
                       w5_ref, b5_ref,
                       w6_ref, b6_ref,
                       o_ref):
    """Fused eval-mode forward: 5 lane-dense matmuls + bias + ReLU.

    BN (eval) is pre-folded into the weights/biases; Dropout is identity in
    eval; the activation-free Linear(64,latent)->Linear(latent,64) pair is
    pre-merged into a single matmul.
    """
    h = x_ref[...]                                                     # bf16 [TB, Dp]

    h = jnp.dot(h, w1_ref[...], preferred_element_type=jnp.float32) + b1_ref[...]
    h = jnp.maximum(h, 0.0).astype(w2_ref.dtype)

    h = jnp.dot(h, w2_ref[...], preferred_element_type=jnp.float32) + b2_ref[...]
    h = jnp.maximum(h, 0.0).astype(w34_ref.dtype)

    h = jnp.dot(h, w34_ref[...], preferred_element_type=jnp.float32) + b34_ref[...]
    h = jnp.maximum(h, 0.0).astype(w5_ref.dtype)

    h = jnp.dot(h, w5_ref[...], preferred_element_type=jnp.float32) + b5_ref[...]
    h = jnp.maximum(h, 0.0).astype(w6_ref.dtype)

    out = jnp.dot(h, w6_ref[...], preferred_element_type=jnp.float32) + b6_ref[...]
    o_ref[...] = out.astype(o_ref.dtype)                               # bf16 store


# --------------------------------------------------------------------------- #
# Parameter preparation (host side)
# --------------------------------------------------------------------------- #
def _bn_fold(w, b, gamma, beta, mean, var, eps=1e-5):
    """Fold eval-mode BatchNorm1d into the preceding Linear: (x@w+b)*s+t."""
    scale = gamma / jnp.sqrt(var + eps)
    shift = beta - mean * scale
    return w * scale[None, :], b * scale[None, :] + shift[None, :]


def _pad2(a, rows, cols):
    r, c = a.shape
    return jnp.pad(a, ((0, rows - r), (0, cols - c)))


def prepare_kernel_params(raw, input_dim, compute_dtype=jnp.bfloat16):
    """Fold BN, merge the latent-bottleneck pair, pad to lane-dense, cast."""
    (w1, b1, bn1, w2, b2, bn2, w3, b3, w4, b4, bn4, w5, b5, bn5, w6, b6) = raw
    Dp = _round_up(input_dim, 128)

    w1f, b1f = _bn_fold(w1, b1, *bn1)
    w2f, b2f = _bn_fold(w2, b2, *bn2)
    w4f, b4f = _bn_fold(w4, b4, *bn4)
    w5f, b5f = _bn_fold(w5, b5, *bn5)

    # No nonlinearity between encoder tail and decoder head -> merge (z unused).
    w34 = w3 @ w4f
    b34 = b3 @ w4f + b4f

    params = (
        _pad2(w1f, Dp, 128).astype(compute_dtype),  b1f.astype(jnp.float32),
        _pad2(w2f, 128, 128).astype(compute_dtype), _pad2(b2f, 1, 128).astype(jnp.float32),
        _pad2(w34, 128, 128).astype(compute_dtype), _pad2(b34, 1, 128).astype(jnp.float32),
        _pad2(w5f, 128, 128).astype(compute_dtype), b5f.astype(jnp.float32),
        _pad2(w6, 128, Dp).astype(compute_dtype),   _pad2(b6, 1, Dp).astype(jnp.float32),
    )
    return params


# --------------------------------------------------------------------------- #
# Tile selection
# --------------------------------------------------------------------------- #
def _choose_tile(batch, tb_max):
    """Pick (TB, Bp).

    TB <= tb_max, multiple of 16 (bf16 sublane packing). The grid length
    Bp // TB is forced EVEN and >= 2 so the "parallel" batch axis can be split
    across both TensorCores on v7x while keeping padding waste to <= one tile.
    """
    tb_max = max(16, (tb_max // 16) * 16)
    steps = max(2, pl.cdiv(batch, tb_max))
    if steps % 2:
        steps += 1
    tb = min(tb_max, _round_up(pl.cdiv(batch, steps), 16))
    return tb, steps * tb


# --------------------------------------------------------------------------- #
# Wrapper
# --------------------------------------------------------------------------- #
@functools.partial(jax.jit, static_argnames=("tb",))
def autoencoder_forward(x, params, *, tb=512):
    B, D = x.shape
    Dp = params[0].shape[0]                      # padded feature dim (multiple of 128)
    compute_dtype = params[0].dtype
    itemsize = jnp.dtype(compute_dtype).itemsize

    TB, Bp = _choose_tile(B, tb)

    # Single fused pad+cast; allow_input_fusion lets XLA fold it into the
    # pallas operand instead of materializing a padded copy in HBM.
    xp = jnp.pad(x.astype(compute_dtype), ((0, Bp - B), (0, Dp - D)))

    def const_map(i):
        return (0, 0)

    # Weights/biases never change block across the grid -> single buffer.
    weight_specs = [
        pl.BlockSpec(p.shape, const_map, pipeline_mode=pl.Buffered(1))
        for p in params
    ]

    # VMEM budget: resident weights + double-buffered x/out tiles + headroom
    # for the f32 intermediate activation chain inside the body.
    param_bytes = sum(int(p.size) * p.dtype.itemsize for p in params)
    tile_bytes = TB * Dp * itemsize
    vmem_limit = int(param_bytes + 4 * tile_bytes + 8 * TB * 128 * 4)
    vmem_limit = min(max(2 * vmem_limit, 8 * 1024 * 1024), 64 * 1024 * 1024)

    flops = 2 * Bp * 128 * (2 * Dp + 3 * 128)
    bytes_accessed = int(param_bytes + 2 * Bp * Dp * itemsize)   # bf16 in + bf16 out

    out = pl.pallas_call(
        autoencoder_kernel,
        out_shape=jax.ShapeDtypeStruct((Bp, Dp), compute_dtype),
        grid_spec=pltpu.PrefetchScalarGridSpec(
            num_scalar_prefetch=0,
            grid=(Bp // TB,),
            in_specs=[pl.BlockSpec((TB, Dp), lambda i: (i, 0))] + weight_specs,
            out_specs=pl.BlockSpec((TB, Dp), lambda i: (i, 0)),
        ),
        compiler_params=pltpu.CompilerParams(
            dimension_semantics=("parallel",),
            allow_input_fusion=[True] + [False] * len(params),
            vmem_limit_bytes=vmem_limit,
        ),
        cost_estimate=pl.CostEstimate(
            flops=flops, transcendentals=0, bytes_accessed=bytes_accessed),
    )(xp, *params)

    # Keep the kernel's store lane-dense; crop afterwards (fuses into consumer).
    return out[:B, :D]


# --------------------------------------------------------------------------- #
# Raw (PyTorch-equivalent) parameters + f32 reference
# --------------------------------------------------------------------------- #
def make_raw_params(key, input_dim, latent_dim=16):
    keys = jax.random.split(key, 10)

    def linear(k, fan_in, fan_out):
        kw, kb = jax.random.split(k)
        bound = 1.0 / jnp.sqrt(float(fan_in))
        w = jax.random.uniform(kw, (fan_in, fan_out), jnp.float32, -bound, bound)
        b = jax.random.uniform(kb, (1, fan_out), jnp.float32, -bound, bound)
        return w, b

    def bn_stats(k, n):
        k1, k2, k3, k4 = jax.random.split(k, 4)
        gamma = 1.0 + 0.1 * jax.random.normal(k1, (n,), jnp.float32)
        beta = 0.1 * jax.random.normal(k2, (n,), jnp.float32)
        mean = 0.1 * jax.random.normal(k3, (n,), jnp.float32)
        var = jnp.abs(1.0 + 0.1 * jax.random.normal(k4, (n,), jnp.float32))
        return (gamma, beta, mean, var)

    w1, b1 = linear(keys[0], input_dim, 128)
    w2, b2 = linear(keys[1], 128, 64)
    w3, b3 = linear(keys[2], 64, latent_dim)
    w4, b4 = linear(keys[3], latent_dim, 64)
    w5, b5 = linear(keys[4], 64, 128)
    w6, b6 = linear(keys[5], 128, input_dim)
    bn1 = bn_stats(keys[6], 128)
    bn2 = bn_stats(keys[7], 64)
    bn4 = bn_stats(keys[8], 64)
    bn5 = bn_stats(keys[9], 128)
    return (w1, b1, bn1, w2, b2, bn2, w3, b3, w4, b4, bn4, w5, b5, bn5, w6, b6)


def reference_forward(x, raw, eps=1e-5):
    """Pure-JAX f32 reference mirroring the PyTorch module in eval mode."""
    (w1, b1, bn1, w2, b2, bn2, w3, b3, w4, b4, bn4, w5, b5, bn5, w6, b6) = raw

    def bn(h, stats):
        gamma, beta, mean, var = stats
        return (h - mean) / jnp.sqrt(var + eps) * gamma + beta

    h = jnp.maximum(bn(x @ w1 + b1, bn1), 0.0)     # Dropout: identity in eval
    h = jnp.maximum(bn(h @ w2 + b2, bn2), 0.0)
    z = h @ w3 + b3
    h = jnp.maximum(bn(z @ w4 + b4, bn4), 0.0)
    h = jnp.maximum(bn(h @ w5 + b5, bn5), 0.0)
    return h @ w6 + b6


# --------------------------------------------------------------------------- #
if __name__ == "__main__":
    key = jax.random.PRNGKey(0)
    k_x, k_p = jax.random.split(key)

    batch = 200        # not a multiple of the batch tile (tests row padding + even grid)
    input_dim = 72     # not a multiple of 128 lanes (tests feature padding)
    latent_dim = 16

    x = jax.random.normal(k_x, (batch, input_dim), jnp.float32)
    raw = make_raw_params(k_p, input_dim, latent_dim)
    params = prepare_kernel_params(raw, input_dim, compute_dtype=jnp.bfloat16)

    out = jax.block_until_ready(autoencoder_forward(x, params, tb=512))
    ref = reference_forward(x, raw)

    assert out.shape == (batch, input_dim)
    # bf16 operands/output (f32 accumulate) -> loosened tolerance vs f32 reference.
    assert jnp.allclose(out.astype(jnp.float32), ref, atol=5e-2, rtol=5e-2), \
        float(jnp.max(jnp.abs(out.astype(jnp.float32) - ref)))

    print("KERNEL_OK")
</pallas_src>

<mosaic_0001>
module attributes {stable_mosaic.version = 11 : i64} {
  func.func @autoencoder_kernel(%arg0: i32, %arg1: memref<112x128xbf16, #tpu.memory_space<vmem>>, %arg2: memref<128x128xbf16, #tpu.memory_space<vmem>>, %arg3: memref<1x128xf32, #tpu.memory_space<vmem>>, %arg4: memref<128x128xbf16, #tpu.memory_space<vmem>>, %arg5: memref<1x128xf32, #tpu.memory_space<vmem>>, %arg6: memref<128x128xbf16, #tpu.memory_space<vmem>>, %arg7: memref<1x128xf32, #tpu.memory_space<vmem>>, %arg8: memref<128x128xbf16, #tpu.memory_space<vmem>>, %arg9: memref<1x128xf32, #tpu.memory_space<vmem>>, %arg10: memref<128x128xbf16, #tpu.memory_space<vmem>>, %arg11: memref<1x128xf32, #tpu.memory_space<vmem>>, %arg12: memref<112x128xbf16, #tpu.memory_space<vmem>>) attributes {dimension_semantics = [#tpu.dimension_semantics<parallel>], iteration_bounds = array<i64: 2>, scalar_prefetch = 0 : i64, scratch_operands = 0 : i64, tpu.core_type = #tpu.core_type<tc>, window_params = [{transform_indices = @transform_0, window_bounds = array<i64: 112, 128>}, {pipeline_mode = #tpu.pipeline_mode<synchronous>, transform_indices = @transform_1, window_bounds = array<i64: 128, 128>}, {pipeline_mode = #tpu.pipeline_mode<synchronous>, transform_indices = @transform_2, window_bounds = array<i64: 1, 128>}, {pipeline_mode = #tpu.pipeline_mode<synchronous>, transform_indices = @transform_3, window_bounds = array<i64: 128, 128>}, {pipeline_mode = #tpu.pipeline_mode<synchronous>, transform_indices = @transform_4, window_bounds = array<i64: 1, 128>}, {pipeline_mode = #tpu.pipeline_mode<synchronous>, transform_indices = @transform_5, window_bounds = array<i64: 128, 128>}, {pipeline_mode = #tpu.pipeline_mode<synchronous>, transform_indices = @transform_6, window_bounds = array<i64: 1, 128>}, {pipeline_mode = #tpu.pipeline_mode<synchronous>, transform_indices = @transform_7, window_bounds = array<i64: 128, 128>}, {pipeline_mode = #tpu.pipeline_mode<synchronous>, transform_indices = @transform_8, window_bounds = array<i64: 1, 128>}, {pipeline_mode = #tpu.pipeline_mode<synchronous>, transform_indices = @transform_9, window_bounds = array<i64: 128, 128>}, {pipeline_mode = #tpu.pipeline_mode<synchronous>, transform_indices = @transform_10, window_bounds = array<i64: 1, 128>}, {transform_indices = @transform_11, window_bounds = array<i64: 112, 128>}]} {
    %c0 = arith.constant 0 : index
    %c0_0 = arith.constant 0 : index
    %0 = vector.load %arg1[%c0, %c0_0] : memref<112x128xbf16, #tpu.memory_space<vmem>>, vector<112x128xbf16>
    %c0_1 = arith.constant 0 : index
    %c0_2 = arith.constant 0 : index
    %1 = vector.load %arg2[%c0_1, %c0_2] : memref<128x128xbf16, #tpu.memory_space<vmem>>, vector<128x128xbf16>
    %cst = arith.constant dense<0.000000e+00> : vector<112x128xf32>
    %2 = tpu.matmul %0, %1, %cst {dimension_numbers = #tpu.dot_dimension_numbers<[1], [0], [0], [1], [0, 0, 1, 1], [], []>} : vector<112x128xbf16>, vector<128x128xbf16>, vector<112x128xf32> -> vector<112x128xf32>
    %c0_3 = arith.constant 0 : index
    %c0_4 = arith.constant 0 : index
    %3 = vector.load %arg3[%c0_3, %c0_4] : memref<1x128xf32, #tpu.memory_space<vmem>>, vector<1x128xf32>
    %4 = vector.broadcast %3 : vector<1x128xf32> to vector<112x128xf32>
    %5 = arith.addf %2, %4 : vector<112x128xf32>
    %cst_5 = arith.constant 0.000000e+00 : f32
    %6 = vector.broadcast %cst_5 : f32 to vector<112x128xf32>
    %7 = arith.maximumf %5, %6 : vector<112x128xf32>
    %8 = arith.truncf %7 : vector<112x128xf32> to vector<112x128xbf16>
    %c0_6 = arith.constant 0 : index
    %c0_7 = arith.constant 0 : index
    %9 = vector.load %arg4[%c0_6, %c0_7] : memref<128x128xbf16, #tpu.memory_space<vmem>>, vector<128x128xbf16>
    %cst_8 = arith.constant dense<0.000000e+00> : vector<112x128xf32>
    %10 = tpu.matmul %8, %9, %cst_8 {dimension_numbers = #tpu.dot_dimension_numbers<[1], [0], [0], [1], [0, 0, 1, 1], [], []>} : vector<112x128xbf16>, vector<128x128xbf16>, vector<112x128xf32> -> vector<112x128xf32>
    %c0_9 = arith.constant 0 : index
    %c0_10 = arith.constant 0 : index
    %11 = vector.load %arg5[%c0_9, %c0_10] : memref<1x128xf32, #tpu.memory_space<vmem>>, vector<1x128xf32>
    %12 = vector.broadcast %11 : vector<1x128xf32> to vector<112x128xf32>
    %13 = arith.addf %10, %12 : vector<112x128xf32>
    %cst_11 = arith.constant 0.000000e+00 : f32
    %14 = vector.broadcast %cst_11 : f32 to vector<112x128xf32>
    %15 = arith.maximumf %13, %14 : vector<112x128xf32>
    %16 = arith.truncf %15 : vector<112x128xf32> to vector<112x128xbf16>
    %c0_12 = arith.constant 0 : index
    %c0_13 = arith.constant 0 : index
    %17 = vector.load %arg6[%c0_12, %c0_13] : memref<128x128xbf16, #tpu.memory_space<vmem>>, vector<128x128xbf16>
    %cst_14 = arith.constant dense<0.000000e+00> : vector<112x128xf32>
    %18 = tpu.matmul %16, %17, %cst_14 {dimension_numbers = #tpu.dot_dimension_numbers<[1], [0], [0], [1], [0, 0, 1, 1], [], []>} : vector<112x128xbf16>, vector<128x128xbf16>, vector<112x128xf32> -> vector<112x128xf32>
    %c0_15 = arith.constant 0 : index
    %c0_16 = arith.constant 0 : index
    %19 = vector.load %arg7[%c0_15, %c0_16] : memref<1x128xf32, #tpu.memory_space<vmem>>, vector<1x128xf32>
    %20 = vector.broadcast %19 : vector<1x128xf32> to vector<112x128xf32>
    %21 = arith.addf %18, %20 : vector<112x128xf32>
    %cst_17 = arith.constant 0.000000e+00 : f32
    %22 = vector.broadcast %cst_17 : f32 to vector<112x128xf32>
    %23 = arith.maximumf %21, %22 : vector<112x128xf32>
    %24 = arith.truncf %23 : vector<112x128xf32> to vector<112x128xbf16>
    %c0_18 = arith.constant 0 : index
    %c0_19 = arith.constant 0 : index
    %25 = vector.load %arg8[%c0_18, %c0_19] : memref<128x128xbf16, #tpu.memory_space<vmem>>, vector<128x128xbf16>
    %cst_20 = arith.constant dense<0.000000e+00> : vector<112x128xf32>
    %26 = tpu.matmul %24, %25, %cst_20 {dimension_numbers = #tpu.dot_dimension_numbers<[1], [0], [0], [1], [0, 0, 1, 1], [], []>} : vector<112x128xbf16>, vector<128x128xbf16>, vector<112x128xf32> -> vector<112x128xf32>
    %c0_21 = arith.constant 0 : index
    %c0_22 = arith.constant 0 : index
    %27 = vector.load %arg9[%c0_21, %c0_22] : memref<1x128xf32, #tpu.memory_space<vmem>>, vector<1x128xf32>
    %28 = vector.broadcast %27 : vector<1x128xf32> to vector<112x128xf32>
    %29 = arith.addf %26, %28 : vector<112x128xf32>
    %cst_23 = arith.constant 0.000000e+00 : f32
    %30 = vector.broadcast %cst_23 : f32 to vector<112x128xf32>
    %31 = arith.maximumf %29, %30 : vector<112x128xf32>
    %32 = arith.truncf %31 : vector<112x128xf32> to vector<112x128xbf16>
    %c0_24 = arith.constant 0 : index
    %c0_25 = arith.constant 0 : index
    %33 = vector.load %arg10[%c0_24, %c0_25] : memref<128x128xbf16, #tpu.memory_space<vmem>>, vector<128x128xbf16>
    %cst_26 = arith.constant dense<0.000000e+00> : vector<112x128xf32>
    %34 = tpu.matmul %32, %33, %cst_26 {dimension_numbers = #tpu.dot_dimension_numbers<[1], [0], [0], [1], [0, 0, 1, 1], [], []>} : vector<112x128xbf16>, vector<128x128xbf16>, vector<112x128xf32> -> vector<112x128xf32>
    %c0_27 = arith.constant 0 : index
    %c0_28 = arith.constant 0 : index
    %35 = vector.load %arg11[%c0_27, %c0_28] : memref<1x128xf32, #tpu.memory_space<vmem>>, vector<1x128xf32>
    %36 = vector.broadcast %35 : vector<1x128xf32> to vector<112x128xf32>
    %37 = arith.addf %34, %36 : vector<112x128xf32>
    %38 = arith.truncf %37 : vector<112x128xf32> to vector<112x128xbf16>
    %c0_29 = arith.constant 0 : index
    %c0_30 = arith.constant 0 : index
    %39 = vector.load %arg12[%c0_29, %c0_30] : memref<112x128xbf16, #tpu.memory_space<vmem>>, vector<112x128xbf16>
    tpu.vector_store %arg12[%c0_29, %c0_30], %38 {strides = array<i32>} : memref<112x128xbf16, #tpu.memory_space<vmem>>, vector<112x128xbf16>,
    return
  }
  func.func @transform_0(%arg0: i32) -> (i32, i32) {
    %c0_i32 = arith.constant 0 : i32
    %c0_i32_0 = arith.constant 0 : i32
    return %arg0, %c0_i32 : i32, i32
  }
  func.func @transform_1(%arg0: i32) -> (i32, i32) {
    %c0_i32 = arith.constant 0 : i32
    %c0_i32_0 = arith.constant 0 : i32
    %c0_i32_1 = arith.constant 0 : i32
    return %c0_i32, %c0_i32_0 : i32, i32
  }
  func.func @transform_2(%arg0: i32) -> (i32, i32) {
    %c0_i32 = arith.constant 0 : i32
    %c0_i32_0 = arith.constant 0 : i32
    %c0_i32_1 = arith.constant 0 : i32
    return %c0_i32, %c0_i32_0 : i32, i32
  }
  func.func @transform_3(%arg0: i32) -> (i32, i32) {
    %c0_i32 = arith.constant 0 : i32
    %c0_i32_0 = arith.constant 0 : i32
    %c0_i32_1 = arith.constant 0 : i32
    return %c0_i32, %c0_i32_0 : i32, i32
  }
  func.func @transform_4(%arg0: i32) -> (i32, i32) {
    %c0_i32 = arith.constant 0 : i32
    %c0_i32_0 = arith.constant 0 : i32
    %c0_i32_1 = arith.constant 0 : i32
    return %c0_i32, %c0_i32_0 : i32, i32
  }
  func.func @transform_5(%arg0: i32) -> (i32, i32) {
    %c0_i32 = arith.constant 0 : i32
    %c0_i32_0 = arith.constant 0 : i32
    %c0_i32_1 = arith.constant 0 : i32
    return %c0_i32, %c0_i32_0 : i32, i32
  }
  func.func @transform_6(%arg0: i32) -> (i32, i32) {
    %c0_i32 = arith.constant 0 : i32
    %c0_i32_0 = arith.constant 0 : i32
    %c0_i32_1 = arith.constant 0 : i32
    return %c0_i32, %c0_i32_0 : i32, i32
  }
  func.func @transform_7(%arg0: i32) -> (i32, i32) {
    %c0_i32 = arith.constant 0 : i32
    %c0_i32_0 = arith.constant 0 : i32
    %c0_i32_1 = arith.constant 0 : i32
    return %c0_i32, %c0_i32_0 : i32, i32
  }
  func.func @transform_8(%arg0: i32) -> (i32, i32) {
    %c0_i32 = arith.constant 0 : i32
    %c0_i32_0 = arith.constant 0 : i32
    %c0_i32_1 = arith.constant 0 : i32
    return %c0_i32, %c0_i32_0 : i32, i32
  }
  func.func @transform_9(%arg0: i32) -> (i32, i32) {
    %c0_i32 = arith.constant 0 : i32
    %c0_i32_0 = arith.constant 0 : i32
    %c0_i32_1 = arith.constant 0 : i32
    return %c0_i32, %c0_i32_0 : i32, i32
  }
  func.func @transform_10(%arg0: i32) -> (i32, i32) {
    %c0_i32 = arith.constant 0 : i32
    %c0_i32_0 = arith.constant 0 : i32
    %c0_i32_1 = arith.constant 0 : i32
    return %c0_i32, %c0_i32_0 : i32, i32
  }
  func.func @transform_11(%arg0: i32) -> (i32, i32) {
    %c0_i32 = arith.constant 0 : i32
    %c0_i32_0 = arith.constant 0 : i32
    return %arg0, %c0_i32 : i32, i32
  }
}

</mosaic_0001>

<llo_original>
// kernel: autoencoder_forward.2
$region0: #{autoencoder_forward.2}
  #allocation0 [shape = 'u32[]', space=smem, size = 0x4, offset = 0x4, fixed_abs, tag = 'smem constant byte address 0x4 - core index']
  #allocation1 [shape = 'u32[144,128]{1,0:T(1,128)}', space=vmem, size = 0x12000, scoped, tag = 'internal scratch']
  #allocation2 [shape = 'u32[2048]{0}', space=vmem, size = 0x2000, scoped, tag = 'scoped memory for autoencoder_forward.2']
  #allocation3 [shape = 'u32[2048]{0}', space=vmem, size = 0x2000, scoped, tag = 'scoped memory for autoencoder_forward.2']
  #allocation4 [shape = 'u32[2048]{0}', space=vmem, size = 0x2000, scoped, tag = 'scoped memory for autoencoder_forward.2']
  #allocation5 [shape = 'u32[2048]{0}', space=vmem, size = 0x2000, scoped, tag = 'scoped memory for autoencoder_forward.2']
  #allocation6 [shape = 'u32[2048]{0}', space=vmem, size = 0x2000, scoped, tag = 'scoped memory for autoencoder_forward.2']
  %s0 = inlined_call_operand.vmem [shape: bf16[128,128], index: 0, kind: input, shape index: {}]
  %s1 = inlined_call_operand.vmem [shape: f32[1,128], index: 1, kind: input, shape index: {}]
  %s2 = inlined_call_operand.vmem [shape: bf16[128,128], index: 2, kind: input, shape index: {}]
  %s3 = inlined_call_operand.vmem [shape: f32[1,128], index: 3, kind: input, shape index: {}]
  %s4 = inlined_call_operand.vmem [shape: bf16[128,128], index: 4, kind: input, shape index: {}]
  %s5 = inlined_call_operand.vmem [shape: f32[1,128], index: 5, kind: input, shape index: {}]
  %s6 = inlined_call_operand.vmem [shape: bf16[128,128], index: 6, kind: input, shape index: {}]
  %s7 = inlined_call_operand.vmem [shape: f32[1,128], index: 7, kind: input, shape index: {}]
  %s8 = inlined_call_operand.vmem [shape: bf16[128,128], index: 8, kind: input, shape index: {}]
  %s9 = inlined_call_operand.vmem [shape: f32[1,128], index: 9, kind: input, shape index: {}]
  %s10 = inlined_call_operand.vmem [shape: bf16[200,72], index: 10, kind: input, shape index: {}]
  %s11 = inlined_call_operand.<no memory space> [shape: bf16[], index: 11, kind: input, shape index: {}]
  %s12 = inlined_call_operand.vmem [shape: bf16[224,128], index: 12, kind: output, shape index: {}]
  %s13 = sld [smem:[#allocation0]]
  $region77: #{autoencoder_forward.2} parent=0
    _
  %s15 = ssub.s32 1, %s13
  %s16 = scalar_select 0, %s15, %s13
  %v17 = vstv %s11
  %v18 = vunpack.i.l.bf16 %v17
  %v20 = vunpack.i.h.bf16 %v17
  loop: start=0, step=1, limit=4
  $region2: #{autoencoder_forward.2} parent=0 // loop_pre_header
    _
  $region3: #{autoencoder_forward.2} parent=0 // loop_header
    %s23 = sphi 0, %s27
    %p24 = scmp.ge.s32.totalorder %s23, 4
    %s33 = sphi 0, %s35
    %s36 = sphi 0, %s33
    %s37 = sphi 0, %s36
    %s53 = sphi 0, %s37
    %s57 = sphi 0, %s57
    %s59 = sphi 0, %s57
    %s60 = sphi 0, %s59
    %s74 = sphi 0, %s60
    %s78 = sphi 0, %s78
    %s80 = sphi 0, %s78
    %s81 = sphi 0, %s80
    %s95 = sphi 0, %s81
    %s99 = sphi 0, %s99
    %s101 = sphi 0, %s99
    %s102 = sphi 0, %s101
    %s116 = sphi 0, %s102
    %s120 = sphi 0, %s120
    %s122 = sphi 0, %s120
    %s123 = sphi 0, %s122
    %s137 = sphi 0, %s123
    %s141 = sphi 0, %s141
    %s143 = sphi 0, %s141
    %s144 = sphi 0, %s143
    %s158 = sphi 0, %s144
    %s162 = sphi 0, %s162
    %s164 = sphi 0, %s162
    %s165 = sphi 0, %s164
    %s179 = sphi 0, %s165
    %s183 = sphi 0, %s183
    %s185 = sphi 0, %s183
    %s186 = sphi 0, %s185
    %s200 = sphi 0, %s186
    %s204 = sphi 0, %s204
    %s206 = sphi 0, %s204
    %s207 = sphi 0, %s206
    %s221 = sphi 0, %s207
    %s225 = sphi 0, %s225
    %s227 = sphi 0, %s225
    %s228 = sphi 0, %s227
    %s242 = sphi 0, %s228
    %s246 = sphi 0, %s246
    %s248 = sphi 0, %s246
    %s249 = sphi 0, %s248
    %s263 = sphi 0, %s249
    %s269 = sphi 0, %s271
    %s272 = sphi 0, %s269
    %s273 = sphi 0, %s272
    %s289 = sphi 0, %s273
  $region4: #{autoencoder_forward.2} parent=0 // loop_header_branch
    %26 = sbr.rel (%p24) target = $region8
  $region5: #{autoencoder_forward.2} parent=0 // loop_body
    %s28 = ssub.s32 %s23, 1
    %s29 = ssub.s32 %s23, 2
    %s30 = sadd.s32 %s23, 1
    %s31 = ssub.s32 %s23, %s30
    %p32 = scmp.eq.s32.totalorder %s31, 0
    %s34 = sadd.s32 %s33, 1
    %s35 = scalar_select %p32, %s33, %s34
    %p38 = pneg %p32
    %p39 = scmp.eq.s32.totalorder %s23, 1
    %p40 = por %p38, %p39
    %p41 = scmp.ne.s32.totalorder %s33, %s36
    %p42 = scmp.eq.s32.totalorder %s23, 0
    %p43 = por %p41, %p42
    %p44 = scmp.ne.s32.totalorder %s33, %s36
    %p45 = scmp.eq.s32.totalorder %s28, 1
    %p46 = por %p44, %p45
    %p47 = scmp.ne.s32.totalorder %s36, %s37
    %p48 = scmp.eq.s32.totalorder %s28, 0
    %p49 = por %p47, %p48
    %p50 = scmp.ne.s32.totalorder %s36, %s37
    %p51 = scmp.eq.s32.totalorder %s29, 1
    %p52 = por %p50, %p51
    %p54 = scmp.ne.s32.totalorder %s37, %s53
    %p55 = scmp.eq.s32.totalorder %s29, 0
    %p56 = por %p54, %p55
    %s58 = sadd.s32 %s57, 1
    %p61 = scmp.eq.s32.totalorder %s23, 1
    %p62 = scmp.ne.s32.totalorder %s57, %s59
    %p63 = scmp.eq.s32.totalorder %s23, 0
    %p64 = por %p62, %p63
    %p65 = scmp.ne.s32.totalorder %s57, %s59
    %p66 = scmp.eq.s32.totalorder %s28, 1
    %p67 = por %p65, %p66
    %p68 = scmp.ne.s32.totalorder %s59, %s60
    %p69 = scmp.eq.s32.totalorder %s28, 0
    %p70 = por %p68, %p69
    %p71 = scmp.ne.s32.totalorder %s59, %s60
    %p72 = scmp.eq.s32.totalorder %s29, 1
    %p73 = por %p71, %p72
    %p75 = scmp.ne.s32.totalorder %s60, %s74
    %p76 = scmp.eq.s32.totalorder %s29, 0
    %p77 = por %p75, %p76
    %s79 = sadd.s32 %s78, 1
    %p82 = scmp.eq.s32.totalorder %s23, 1
    %p83 = scmp.ne.s32.totalorder %s78, %s80
    %p84 = scmp.eq.s32.totalorder %s23, 0
    %p85 = por %p83, %p84
    %p86 = scmp.ne.s32.totalorder %s78, %s80
    %p87 = scmp.eq.s32.totalorder %s28, 1
    %p88 = por %p86, %p87
    %p89 = scmp.ne.s32.totalorder %s80, %s81
    %p90 = scmp.eq.s32.totalorder %s28, 0
    %p91 = por %p89, %p90
    %p92 = scmp.ne.s32.totalorder %s80, %s81
    %p93 = scmp.eq.s32.totalorder %s29, 1
    %p94 = por %p92, %p93
    %p96 = scmp.ne.s32.totalorder %s81, %s95
    %p97 = scmp.eq.s32.totalorder %s29, 0
    %p98 = por %p96, %p97
    %s100 = sadd.s32 %s99, 1
    %p103 = scmp.eq.s32.totalorder %s23, 1
    %p104 = scmp.ne.s32.totalorder %s99, %s101
    %p105 = scmp.eq.s32.totalorder %s23, 0
    %p106 = por %p104, %p105
    %p107 = scmp.ne.s32.totalorder %s99, %s101
    %p108 = scmp.eq.s32.totalorder %s28, 1
    %p109 = por %p107, %p108
    %p110 = scmp.ne.s32.totalorder %s101, %s102
    %p111 = scmp.eq.s32.totalorder %s28, 0
    %p112 = por %p110, %p111
    %p113 = scmp.ne.s32.totalorder %s101, %s102
    %p114 = scmp.eq.s32.totalorder %s29, 1
    %p115 = por %p113, %p114
    %p117 = scmp.ne.s32.totalorder %s102, %s116
    %p118 = scmp.eq.s32.totalorder %s29, 0
    %p119 = por %p117, %p118
    %s121 = sadd.s32 %s120, 1
    %p124 = scmp.eq.s32.totalorder %s23, 1
    %p125 = scmp.ne.s32.totalorder %s120, %s122
    %p126 = scmp.eq.s32.totalorder %s23, 0
    %p127 = por %p125, %p126
    %p128 = scmp.ne.s32.totalorder %s120, %s122
    %p129 = scmp.eq.s32.totalorder %s28, 1
    %p130 = por %p128, %p129
    %p131 = scmp.ne.s32.totalorder %s122, %s123
    %p132 = scmp.eq.s32.totalorder %s28, 0
    %p133 = por %p131, %p132
    %p134 = scmp.ne.s32.totalorder %s122, %s123
    %p135 = scmp.eq.s32.totalorder %s29, 1
    %p136 = por %p134, %p135
    %p138 = scmp.ne.s32.totalorder %s123, %s137
    %p139 = scmp.eq.s32.totalorder %s29, 0
    %p140 = por %p138, %p139
    %s142 = sadd.s32 %s141, 1
    %p145 = scmp.eq.s32.totalorder %s23, 1
    %p146 = scmp.ne.s32.totalorder %s141, %s143
    %p147 = scmp.eq.s32.totalorder %s23, 0
    %p148 = por %p146, %p147
    %p149 = scmp.ne.s32.totalorder %s141, %s143
    %p150 = scmp.eq.s32.totalorder %s28, 1
    %p151 = por %p149, %p150
    %p152 = scmp.ne.s32.totalorder %s143, %s144
    %p153 = scmp.eq.s32.totalorder %s28, 0
    %p154 = por %p152, %p153
    %p155 = scmp.ne.s32.totalorder %s143, %s144
    %p156 = scmp.eq.s32.totalorder %s29, 1
    %p157 = por %p155, %p156
    %p159 = scmp.ne.s32.totalorder %s144, %s158
    %p160 = scmp.eq.s32.totalorder %s29, 0
    %p161 = por %p159, %p160
    %s163 = sadd.s32 %s162, 1
    %p166 = scmp.eq.s32.totalorder %s23, 1
    %p167 = scmp.ne.s32.totalorder %s162, %s164
    %p168 = scmp.eq.s32.totalorder %s23, 0
    %p169 = por %p167, %p168
    %p170 = scmp.ne.s32.totalorder %s162, %s164
    %p171 = scmp.eq.s32.totalorder %s28, 1
    %p172 = por %p170, %p171
    %p173 = scmp.ne.s32.totalorder %s164, %s165
    %p174 = scmp.eq.s32.totalorder %s28, 0
    %p175 = por %p173, %p174
    %p176 = scmp.ne.s32.totalorder %s164, %s165
    %p177 = scmp.eq.s32.totalorder %s29, 1
    %p178 = por %p176, %p177
    %p180 = scmp.ne.s32.totalorder %s165, %s179
    %p181 = scmp.eq.s32.totalorder %s29, 0
    %p182 = por %p180, %p181
    %s184 = sadd.s32 %s183, 1
    %p187 = scmp.eq.s32.totalorder %s23, 1
    %p188 = scmp.ne.s32.totalorder %s183, %s185
    %p189 = scmp.eq.s32.totalorder %s23, 0
    %p190 = por %p188, %p189
    %p191 = scmp.ne.s32.totalorder %s183, %s185
    %p192 = scmp.eq.s32.totalorder %s28, 1
    %p193 = por %p191, %p192
    %p194 = scmp.ne.s32.totalorder %s185, %s186
    %p195 = scmp.eq.s32.totalorder %s28, 0
    %p196 = por %p194, %p195
    %p197 = scmp.ne.s32.totalorder %s185, %s186
    %p198 = scmp.eq.s32.totalorder %s29, 1
    %p199 = por %p197, %p198
    %p201 = scmp.ne.s32.totalorder %s186, %s200
    %p202 = scmp.eq.s32.totalorder %s29, 0
    %p203 = por %p201, %p202
    %s205 = sadd.s32 %s204, 1
    %p208 = scmp.eq.s32.totalorder %s23, 1
    %p209 = scmp.ne.s32.totalorder %s204, %s206
    %p210 = scmp.eq.s32.totalorder %s23, 0
    %p211 = por %p209, %p210
    %p212 = scmp.ne.s32.totalorder %s204, %s206
    %p213 = scmp.eq.s32.totalorder %s28, 1
    %p214 = por %p212, %p213
    %p215 = scmp.ne.s32.totalorder %s206, %s207
    %p216 = scmp.eq.s32.totalorder %s28, 0
    %p217 = por %p215, %p216
    %p218 = scmp.ne.s32.totalorder %s206, %s207
    %p219 = scmp.eq.s32.totalorder %s29, 1
    %p220 = por %p218, %p219
    %p222 = scmp.ne.s32.totalorder %s207, %s221
    %p223 = scmp.eq.s32.totalorder %s29, 0
    %p224 = por %p222, %p223
    %s226 = sadd.s32 %s225, 1
    %p229 = scmp.eq.s32.totalorder %s23, 1
    %p230 = scmp.ne.s32.totalorder %s225, %s227
    %p231 = scmp.eq.s32.totalorder %s23, 0
    %p232 = por %p230, %p231
    %p233 = scmp.ne.s32.totalorder %s225, %s227
    %p234 = scmp.eq.s32.totalorder %s28, 1
    %p235 = por %p233, %p234
    %p236 = scmp.ne.s32.totalorder %s227, %s228
    %p237 = scmp.eq.s32.totalorder %s28, 0
    %p238 = por %p236, %p237
    %p239 = scmp.ne.s32.totalorder %s227, %s228
    %p240 = scmp.eq.s32.totalorder %s29, 1
    %p241 = por %p239, %p240
    %p243 = scmp.ne.s32.totalorder %s228, %s242
    %p244 = scmp.eq.s32.totalorder %s29, 0
    %p245 = por %p243, %p244
    %s247 = sadd.s32 %s246, 1
    %p250 = scmp.eq.s32.totalorder %s23, 1
    %p251 = scmp.ne.s32.totalorder %s246, %s248
    %p252 = scmp.eq.s32.totalorder %s23, 0
    %p253 = por %p251, %p252
    %p254 = scmp.ne.s32.totalorder %s246, %s248
    %p255 = scmp.eq.s32.totalorder %s28, 1
    %p256 = por %p254, %p255
    %p257 = scmp.ne.s32.totalorder %s248, %s249
    %p258 = scmp.eq.s32.totalorder %s28, 0
    %p259 = por %p257, %p258
    %p260 = scmp.ne.s32.totalorder %s248, %s249
    %p261 = scmp.eq.s32.totalorder %s29, 1
    %p262 = por %p260, %p261
    %p264 = scmp.ne.s32.totalorder %s249, %s263
    %p265 = scmp.eq.s32.totalorder %s29, 0
    %p266 = por %p264, %p265
    %s267 = ssub.s32 %s23, %s30
    %p268 = scmp.eq.s32.totalorder %s267, 0
    %s270 = sadd.s32 %s269, 1
    %s271 = scalar_select %p268, %s269, %s270
    %p274 = pneg %p268
    %p275 = scmp.eq.s32.totalorder %s23, 1
    %p276 = por %p274, %p275
    %p277 = scmp.ne.s32.totalorder %s269, %s272
    %p278 = scmp.eq.s32.totalorder %s23, 0
    %p279 = por %p277, %p278
    %p280 = scmp.ne.s32.totalorder %s269, %s272
    %p281 = scmp.eq.s32.totalorder %s28, 1
    %p282 = por %p280, %p281
    %p283 = scmp.ne.s32.totalorder %s272, %s273
    %p284 = scmp.eq.s32.totalorder %s28, 0
    %p285 = por %p283, %p284
    %p286 = scmp.ne.s32.totalorder %s272, %s273
    %p287 = scmp.eq.s32.totalorder %s29, 1
    %p288 = por %p286, %p287
    %p290 = scmp.ne.s32.totalorder %s273, %s289
    %p291 = scmp.eq.s32.totalorder %s29, 0
    %p292 = por %p290, %p291
    %p293 = scmp.le.s32.totalorder 1, %s23
    %p294 = scmp.lt.s32.totalorder %s23, 3
    %p295 = pnand %p293, %p294
    %p296 = pneg %p295
    // Predicated region
    $region9: #{autoencoder_forward.2} parent=5 // pred_check
      _
    $region10: #{autoencoder_forward.2} parent=5 // pred_check_branch
      %298 = sbr.rel (%p295) target = $region12
    $region11: #{autoencoder_forward.2} parent=5 // pred_region
      %s299 = ssub.s32 %s23, 1
      // Predicated region
      $region13: #{autoencoder_forward.2} parent=11 // pred_check
        %p300 = pneg %p70
      $region14: #{autoencoder_forward.2} parent=11 // pred_check_branch
        %302 = sbr.rel (%p300) target = $region16
      $region15: #{autoencoder_forward.2} parent=11 // pred_region
        _
      $region16: #{autoencoder_forward.2} parent=11 // pred_fallthru
        _
      // Predicated region
      $region17: #{autoencoder_forward.2} parent=11 // pred_check
        %p303 = pneg %p91
      $region18: #{autoencoder_forward.2} parent=11 // pred_check_branch
        %305 = sbr.rel (%p303) target = $region20
      $region19: #{autoencoder_forward.2} parent=11 // pred_region
        _
      $region20: #{autoencoder_forward.2} parent=11 // pred_fallthru
        _
      // Predicated region
      $region21: #{autoencoder_forward.2} parent=11 // pred_check
        %p306 = pneg %p112
      $region22: #{autoencoder_forward.2} parent=11 // pred_check_branch
        %308 = sbr.rel (%p306) target = $region24
      $region23: #{autoencoder_forward.2} parent=11 // pred_region
        _
      $region24: #{autoencoder_forward.2} parent=11 // pred_fallthru
        _
      // Predicated region
      $region25: #{autoencoder_forward.2} parent=11 // pred_check
        %p309 = pneg %p133
      $region26: #{autoencoder_forward.2} parent=11 // pred_check_branch
        %311 = sbr.rel (%p309) target = $region28
      $region27: #{autoencoder_forward.2} parent=11 // pred_region
        _
      $region28: #{autoencoder_forward.2} parent=11 // pred_fallthru
        _
      // Predicated region
      $region29: #{autoencoder_forward.2} parent=11 // pred_check
        %p312 = pneg %p154
      $region30: #{autoencoder_forward.2} parent=11 // pred_check_branch
        %314 = sbr.rel (%p312) target = $region32
      $region31: #{autoencoder_forward.2} parent=11 // pred_region
        _
      $region32: #{autoencoder_forward.2} parent=11 // pred_fallthru
        _
      // Predicated region
      $region33: #{autoencoder_forward.2} parent=11 // pred_check
        %p315 = pneg %p175
      $region34: #{autoencoder_forward.2} parent=11 // pred_check_branch
        %317 = sbr.rel (%p315) target = $region36
      $region35: #{autoencoder_forward.2} parent=11 // pred_region
        _
      $region36: #{autoencoder_forward.2} parent=11 // pred_fallthru
        _
      // Predicated region
      $region37: #{autoencoder_forward.2} parent=11 // pred_check
        %p318 = pneg %p196
      $region38: #{autoencoder_forward.2} parent=11 // pred_check_branch
        %320 = sbr.rel (%p318) target = $region40
      $region39: #{autoencoder_forward.2} parent=11 // pred_region
        _
      $region40: #{autoencoder_forward.2} parent=11 // pred_fallthru
        _
      // Predicated region
      $region41: #{autoencoder_forward.2} parent=11 // pred_check
        %p321 = pneg %p217
      $region42: #{autoencoder_forward.2} parent=11 // pred_check_branch
        %323 = sbr.rel (%p321) target = $region44
      $region43: #{autoencoder_forward.2} parent=11 // pred_region
        _
      $region44: #{autoencoder_forward.2} parent=11 // pred_fallthru
        _
      // Predicated region
      $region45: #{autoencoder_forward.2} parent=11 // pred_check
        %p324 = pneg %p238
      $region46: #{autoencoder_forward.2} parent=11 // pred_check_branch
        %326 = sbr.rel (%p324) target = $region48
      $region47: #{autoencoder_forward.2} parent=11 // pred_region
        _
      $region48: #{autoencoder_forward.2} parent=11 // pred_fallthru
        _
      // Predicated region
      $region49: #{autoencoder_forward.2} parent=11 // pred_check
        %p327 = pneg %p259
      $region50: #{autoencoder_forward.2} parent=11 // pred_check_branch
        %329 = sbr.rel (%p327) target = $region52
      $region51: #{autoencoder_forward.2} parent=11 // pred_region
        _
      $region52: #{autoencoder_forward.2} parent=11 // pred_fallthru
        _
    $region12: #{autoencoder_forward.2} parent=5 // pred_fallthru
      _
    %p330 = scmp.lt.s32.totalorder %s23, 2
    // Predicated region
    $region53: #{autoencoder_forward.2} parent=5 // pred_check
      %p331 = pneg %p330
    $region54: #{autoencoder_forward.2} parent=5 // pred_check_branch
      %333 = sbr.rel (%p331) target = $region56
    $region55: #{autoencoder_forward.2} parent=5 // pred_region
      // Predicated region
      $region57: #{autoencoder_forward.2} parent=55 // pred_check
        %p334 = pneg %p43
      $region58: #{autoencoder_forward.2} parent=55 // pred_check_branch
        %336 = sbr.rel (%p334) target = $region60
      $region59: #{autoencoder_forward.2} parent=55 // pred_region
        %s337 = smul.u32 14, %s23
        %s338 = ssub.s32 25, %s337
        %p339 = scmp.lt.s32.totalorder %s338, 14
        %s340 = scalar_select %p339, %s338, 14
        %s341 = smul.u32 64, %s340
        %p342 = scmp.lt.s32.totalorder %s337, 24
        %s343 = scalar_select %p342, %s337, 24
        %s344 = smul.addr %s343, 4
        %s345 = scalar_lea.vmem %s10, %s344
        %s346 = smul.u32 14, %s23
        %s347 = ssub.s32 25, %s346
        %p348 = scmp.lt.s32.totalorder %s347, 14
        %s349 = scalar_select %p348, %s347, 14
        %s350 = smul.u32 64, %s349
      $region60: #{autoencoder_forward.2} parent=55 // pred_fallthru
        _
    $region56: #{autoencoder_forward.2} parent=5 // pred_fallthru
      _
    %p351 = scmp.le.s32.totalorder 1, %s23
    %p352 = scmp.lt.s32.totalorder %s23, 3
    %p353 = pnand %p351, %p352
    %p354 = pneg %p353
    // Predicated region
    $region61: #{autoencoder_forward.2} parent=5 // pred_check
      _
    $region62: #{autoencoder_forward.2} parent=5 // pred_check_branch
      %356 = sbr.rel (%p353) target = $region64
    $region63: #{autoencoder_forward.2} parent=5 // pred_region
      #allocation7 [shape = 'u8[28672]{0}', space=vmem, size = 0x7000, dematerialized = true, scoped, tag = 'FusionAdapter Buffer %fusion.1 = bf16[224,128]{1,0:T(8,128)(2,1)} fusion(%param_10.1, %param_11), kind=kLoop, calls=%fused_computation.1.clone, metadata={op_name="jit(autoencoder_forward)/jit(_pad)/pad" stack_frame_id=8}']
      %s357 = ssub.s32 %s23, 1
      %s358 = smul.u32 14, %s28
      %s359 = ssub.s32 25, %s358
      %p360 = scmp.lt.s32.totalorder %s359, 14
      %s361 = scalar_select %p360, %s359, 14
      %s362 = smul.u32 64, %s361
      %p363 = scmp.lt.s32.totalorder %s358, 24
      %s364 = scalar_select %p363, %s358, 24
      %s365 = smul.addr %s364, 4
      %s366 = scalar_lea.vmem %s10, %s365
      %p367 = pneg %p49
      %p368 = pneg %p46
      %p369 = pneg %p70
      %p370 = pneg %p67
      %p371 = pneg %p91
      %p372 = pneg %p88
      %p373 = pneg %p112
      %p374 = pneg %p109
      %p375 = pneg %p133
      %p376 = pneg %p130
      %p377 = pneg %p154
      %p378 = pneg %p151
      %p379 = pneg %p175
      %p380 = pneg %p172
      %p381 = pneg %p196
      %p382 = pneg %p193
      %p383 = pneg %p217
      %p384 = pneg %p214
      %p385 = pneg %p238
      %p386 = pneg %p235
      %p387 = pneg %p259
      %p388 = pneg %p256
      %p389 = pneg %p285
      %p390 = pneg %p282
      %s391 = smul.u32 14, %s28
      %p392 = scmp.lt.s32.totalorder %s391, 27
      %s393 = scalar_select %p392, %s391, 27
      %s394 = smul.addr %s393, 4
      %s395 = scalar_lea.vmem %s12, %s394
      %s396 = smul.u32 14, %s28
      %s397 = ssub.s32 25, %s396
      %p398 = scmp.lt.s32.totalorder %s397, 14
      %s399 = scalar_select %p398, %s397, 14
      %s400 = smul.u32 64, %s399
      %p401 = scmp.lt.s32.totalorder %s396, 24
      %s402 = scalar_select %p401, %s396, 24
      %s403 = smul.addr %s402, 4
      %s404 = scalar_lea.vmem %s10, %s403
      %s405 = smul.u32 14, %s28
      %s406 = ssub.s32 25, %s405
      %p407 = scmp.lt.s32.totalorder %s406, 14
      %s408 = scalar_select %p407, %s406, 14
      %s409 = smul.u32 64, %s408
      %s410 = smul.u32 14, %s28
      %p411 = scmp.lt.s32.totalorder %s410, 27
      %s412 = scalar_select %p411, %s410, 27
      %s413 = smul.addr %s412, 4
      %s414 = scalar_lea.vmem %s12, %s413
      %s415 = smul.u32 14, %s28
      %s417 = sor.u32 255, 127
      %s418 = sand.u32 %s417, 85
      %s419 = sshrl.u32 %s418, 1
      %s420 = sor.u32 %s418, %s419
      %s421 = sand.u32 51, %s420
      %s422 = sshrl.u32 %s421, 2
      %s423 = sor.u32 %s421, %s422
      %s424 = sand.u32 15, %s423
      %v425 = vld [vmem:[%s404] sm:%s424]
      %v426 = vunpack.c.l.bf16 %v425
      %v427 = vunpack.c.h.bf16 %v425
      %v428 = vlaneseq
      %v429 = vand.u32 %v428, 127
      %vm431 = vcmp.lt.s32.totalorder %v429, 72
      %v432 = vsel %vm431, %v426, %v18
      %v433 = vpack.c.bf16 0.0, %v432
      %435 = vst [vmem:[#allocation7] sm:$0xf] %v433
      %s436 = scalar_lea.vmem %s404, 4
      %s438 = sor.u32 255, 127
      %s439 = sand.u32 %s438, 85
      %s440 = sshrl.u32 %s439, 1
      %s441 = sor.u32 %s439, %s440
      %s442 = sand.u32 51, %s441
      %s443 = sshrl.u32 %s442, 2
      %s444 = sor.u32 %s442, %s443
      %s445 = sand.u32 15, %s444
      %v446 = vld [vmem:[%s436] sm:%s445]
      %v447 = vunpack.c.l.bf16 %v446
      %v448 = vunpack.c.h.bf16 %v446
      %v449 = vlaneseq
      %v450 = vand.u32 %v449, 127
      %vm452 = vcmp.lt.s32.totalorder %v450, 72
      %v453 = vsel %vm452, %v447, %v18
      %s454 = scalar_lea.vmem [#allocation7], 4
      %v455 = vpack.c.bf16 0.0, %v453
      %457 = vst [vmem:[%s454] sm:$0xf] %v455
      %s458 = scalar_lea.vmem %s404, 8
      %s460 = sor.u32 255, 127
      %s461 = sand.u32 %s460, 85
      %s462 = sshrl.u32 %s461, 1
      %s463 = sor.u32 %s461, %s462
      %s464 = sand.u32 51, %s463
      %s465 = sshrl.u32 %s464, 2
      %s466 = sor.u32 %s464, %s465
      %s467 = sand.u32 15, %s466
      %v468 = vld [vmem:[%s458] sm:%s467]
      %v469 = vunpack.c.l.bf16 %v468
      %v470 = vunpack.c.h.bf16 %v468
      %v471 = vlaneseq
      %v472 = vand.u32 %v471, 127
      %vm474 = vcmp.lt.s32.totalorder %v472, 72
      %v475 = vsel %vm474, %v469, %v18
      %s476 = scalar_lea.vmem [#allocation7], 8
      %v477 = vpack.c.bf16 0.0, %v475
      %479 = vst [vmem:[%s476] sm:$0xf] %v477
      %s480 = scalar_lea.vmem %s404, 12
      %s482 = sor.u32 255, 127
      %s483 = sand.u32 %s482, 85
      %s484 = sshrl.u32 %s483, 1
      %s485 = sor.u32 %s483, %s484
      %s486 = sand.u32 51, %s485
      %s487 = sshrl.u32 %s486, 2
      %s488 = sor.u32 %s486, %s487
      %s489 = sand.u32 15, %s488
      %v490 = vld [vmem:[%s480] sm:%s489]
      %v491 = vunpack.c.l.bf16 %v490
      %v492 = vunpack.c.h.bf16 %v490
      %v493 = vlaneseq
      %v494 = vand.u32 %v493, 127
      %vm496 = vcmp.lt.s32.totalorder %v494, 72
      %v497 = vsel %vm496, %v491, %v18
      %s498 = scalar_lea.vmem [#allocation7], 12
      %v499 = vpack.c.bf16 0.0, %v497
      %501 = vst [vmem:[%s498] sm:$0xf] %v499
      %s502 = scalar_lea.vmem %s404, 16
      %s504 = sor.u32 255, 127
      %s505 = sand.u32 %s504, 85
      %s506 = sshrl.u32 %s505, 1
      %s507 = sor.u32 %s505, %s506
      %s508 = sand.u32 51, %s507
      %s509 = sshrl.u32 %s508, 2
      %s510 = sor.u32 %s508, %s509
      %s511 = sand.u32 15, %s510
      %v512 = vld [vmem:[%s502] sm:%s511]
      %v513 = vunpack.c.l.bf16 %v512
      %v514 = vunpack.c.h.bf16 %v512
      %v515 = vlaneseq
      %v516 = vand.u32 %v515, 127
      %vm518 = vcmp.lt.s32.totalorder %v516, 72
      %v519 = vsel %vm518, %v513, %v18
      %s520 = scalar_lea.vmem [#allocation7], 16
      %v521 = vpack.c.bf16 0.0, %v519
      %523 = vst [vmem:[%s520] sm:$0xf] %v521
      %s524 = scalar_lea.vmem %s404, 20
      %s526 = sor.u32 255, 127
      %s527 = sand.u32 %s526, 85
      %s528 = sshrl.u32 %s527, 1
      %s529 = sor.u32 %s527, %s528
      %s530 = sand.u32 51, %s529
      %s531 = sshrl.u32 %s530, 2
      %s532 = sor.u32 %s530, %s531
      %s533 = sand.u32 15, %s532
      %v534 = vld [vmem:[%s524] sm:%s533]
      %v535 = vunpack.c.l.bf16 %v534
      %v536 = vunpack.c.h.bf16 %v534
      %v537 = vlaneseq
      %v538 = vand.u32 %v537, 127
      %vm540 = vcmp.lt.s32.totalorder %v538, 72
      %v541 = vsel %vm540, %v535, %v18
      %s542 = scalar_lea.vmem [#allocation7], 20
      %v543 = vpack.c.bf16 0.0, %v541
      %545 = vst [vmem:[%s542] sm:$0xf] %v543
      %s546 = scalar_lea.vmem %s404, 24
      %s548 = sor.u32 255, 127
      %s549 = sand.u32 %s548, 85
      %s550 = sshrl.u32 %s549, 1
      %s551 = sor.u32 %s549, %s550
      %s552 = sand.u32 51, %s551
      %s553 = sshrl.u32 %s552, 2
      %s554 = sor.u32 %s552, %s553
      %s555 = sand.u32 15, %s554
      %v556 = vld [vmem:[%s546] sm:%s555]
      %v557 = vunpack.c.l.bf16 %v556
      %v558 = vunpack.c.h.bf16 %v556
      %v559 = vlaneseq
      %v560 = vand.u32 %v559, 127
      %vm562 = vcmp.lt.s32.totalorder %v560, 72
      %v563 = vsel %vm562, %v557, %v18
      %s564 = scalar_lea.vmem [#allocation7], 24
      %v565 = vpack.c.bf16 0.0, %v563
      %567 = vst [vmem:[%s564] sm:$0xf] %v565
      %s568 = scalar_lea.vmem %s404, 28
      %s570 = sor.u32 255, 127
      %s571 = sand.u32 %s570, 85
      %s572 = sshrl.u32 %s571, 1
      %s573 = sor.u32 %s571, %s572
      %s574 = sand.u32 51, %s573
      %s575 = sshrl.u32 %s574, 2
      %s576 = sor.u32 %s574, %s575
      %s577 = sand.u32 15, %s576
      %v578 = vld [vmem:[%s568] sm:%s577]
      %v579 = vunpack.c.l.bf16 %v578
      %v580 = vunpack.c.h.bf16 %v578
      %v581 = vlaneseq
      %v582 = vand.u32 %v581, 127
      %vm584 = vcmp.lt.s32.totalorder %v582, 72
      %v585 = vsel %vm584, %v579, %v18
      %s586 = scalar_lea.vmem [#allocation7], 28
      %v587 = vpack.c.bf16 0.0, %v585
      %589 = vst [vmem:[%s586] sm:$0xf] %v587
      %s590 = scalar_lea.vmem %s404, 32
      %s592 = sor.u32 255, 127
      %s593 = sand.u32 %s592, 85
      %s594 = sshrl.u32 %s593, 1
      %s595 = sor.u32 %s593, %s594
      %s596 = sand.u32 51, %s595
      %s597 = sshrl.u32 %s596, 2
      %s598 = sor.u32 %s596, %s597
      %s599 = sand.u32 15, %s598
      %v600 = vld [vmem:[%s590] sm:%s599]
      %v601 = vunpack.c.l.bf16 %v600
      %v602 = vunpack.c.h.bf16 %v600
      %v603 = vlaneseq
      %v604 = vand.u32 %v603, 127
      %vm606 = vcmp.lt.s32.totalorder %v604, 72
      %v607 = vsel %vm606, %v601, %v18
      %s608 = scalar_lea.vmem [#allocation7], 32
      %v609 = vpack.c.bf16 0.0, %v607
      %611 = vst [vmem:[%s608] sm:$0xf] %v609
      %s612 = scalar_lea.vmem %s404, 36
      %s614 = sor.u32 255, 127
      %s615 = sand.u32 %s614, 85
      %s616 = sshrl.u32 %s615, 1
      %s617 = sor.u32 %s615, %s616
      %s618 = sand.u32 51, %s617
      %s619 = sshrl.u32 %s618, 2
      %s620 = sor.u32 %s618, %s619
      %s621 = sand.u32 15, %s620
      %v622 = vld [vmem:[%s612] sm:%s621]
      %v623 = vunpack.c.l.bf16 %v622
      %v624 = vunpack.c.h.bf16 %v622
      %v625 = vlaneseq
      %v626 = vand.u32 %v625, 127
      %vm628 = vcmp.lt.s32.totalorder %v626, 72
      %v629 = vsel %vm628, %v623, %v18
      %s630 = scalar_lea.vmem [#allocation7], 36
      %v631 = vpack.c.bf16 0.0, %v629
      %633 = vst [vmem:[%s630] sm:$0xf] %v631
      %s634 = scalar_lea.vmem %s404, 40
      %s636 = sor.u32 255, 127
      %s637 = sand.u32 %s636, 85
      %s638 = sshrl.u32 %s637, 1
      %s639 = sor.u32 %s637, %s638
      %s640 = sand.u32 51, %s639
      %s641 = sshrl.u32 %s640, 2
      %s642 = sor.u32 %s640, %s641
      %s643 = sand.u32 15, %s642
      %v644 = vld [vmem:[%s634] sm:%s643]
      %v645 = vunpack.c.l.bf16 %v644
      %v646 = vunpack.c.h.bf16 %v644
      %v647 = vlaneseq
      %v648 = vand.u32 %v647, 127
      %vm650 = vcmp.lt.s32.totalorder %v648, 72
      %v651 = vsel %vm650, %v645, %v18
      %s652 = scalar_lea.vmem [#allocation7], 40
      %v653 = vpack.c.bf16 0.0, %v651
      %655 = vst [vmem:[%s652] sm:$0xf] %v653
      %s656 = scalar_lea.vmem %s404, 44
      %s657 = sadd.s32 %s405, 11
      %s658 = ssub.s32 24, %s657
      %p659 = scmp.lt.s32.totalorder %s658, 0
      %s660 = scalar_select %p659, 0, 255
      %s661 = sshrl.u32 %s660, 1
      %s662 = sor.u32 %s660, %s661
      %s663 = sand.u32 %s662, 85
      %s664 = sshrl.u32 %s663, 1
      %s665 = sor.u32 %s663, %s664
      %s666 = sand.u32 51, %s665
      %s667 = sshrl.u32 %s666, 2
      %s668 = sor.u32 %s666, %s667
      %s669 = sand.u32 15, %s668
      %v670 = vld [vmem:[%s656] sm:%s669]
      %v671 = vunpack.c.l.bf16 %v670
      %v672 = vunpack.c.h.bf16 %v670
      %s673 = sadd.s32 %s405, 11
      %s674 = ssub.s32 24, %s673
      %v675 = vstv %s674
      %vm676 = vcmp.lt.s32.totalorder %v675, 0
      %v677 = vsel %vm676, %v18, %v671
      %v678 = vlaneseq
      %v679 = vand.u32 %v678, 127
      %vm681 = vcmp.lt.s32.totalorder %v679, 72
      %v682 = vsel %vm681, %v677, %v18
      %s683 = scalar_lea.vmem [#allocation7], 44
      %v684 = vpack.c.bf16 0.0, %v682
      %686 = vst [vmem:[%s683] sm:$0xf] %v684
      %s687 = scalar_lea.vmem %s404, 48
      %s688 = sadd.s32 %s405, 12
      %s689 = ssub.s32 24, %s688
      %p690 = scmp.lt.s32.totalorder %s689, 0
      %s691 = scalar_select %p690, 0, 255
      %s692 = sshrl.u32 %s691, 1
      %s693 = sor.u32 %s691, %s692
      %s694 = sand.u32 %s693, 85
      %s695 = sshrl.u32 %s694, 1
      %s696 = sor.u32 %s694, %s695
      %s697 = sand.u32 51, %s696
      %s698 = sshrl.u32 %s697, 2
      %s699 = sor.u32 %s697, %s698
      %s700 = sand.u32 15, %s699
      %v701 = vld [vmem:[%s687] sm:%s700]
      %v702 = vunpack.c.l.bf16 %v701
      %v703 = vunpack.c.h.bf16 %v701
      %s704 = sadd.s32 %s405, 12
      %s705 = ssub.s32 24, %s704
      %v706 = vstv %s705
      %vm707 = vcmp.lt.s32.totalorder %v706, 0
      %v708 = vsel %vm707, %v18, %v702
      %v709 = vlaneseq
      %v710 = vand.u32 %v709, 127
      %vm712 = vcmp.lt.s32.totalorder %v710, 72
      %v713 = vsel %vm712, %v708, %v18
      %s714 = scalar_lea.vmem [#allocation7], 48
      %v715 = vpack.c.bf16 0.0, %v713
      %717 = vst [vmem:[%s714] sm:$0xf] %v715
      %s718 = scalar_lea.vmem %s404, 52
      %s719 = sadd.s32 %s405, 13
      %s720 = ssub.s32 24, %s719
      %p721 = scmp.lt.s32.totalorder %s720, 0
      %s722 = scalar_select %p721, 0, 255
      %s723 = sshrl.u32 %s722, 1
      %s724 = sor.u32 %s722, %s723
      %s725 = sand.u32 %s724, 85
      %s726 = sshrl.u32 %s725, 1
      %s727 = sor.u32 %s725, %s726
      %s728 = sand.u32 51, %s727
      %s729 = sshrl.u32 %s728, 2
      %s730 = sor.u32 %s728, %s729
      %s731 = sand.u32 15, %s730
      %v732 = vld [vmem:[%s718] sm:%s731]
      %v733 = vunpack.c.l.bf16 %v732
      %v734 = vunpack.c.h.bf16 %v732
      %s735 = sadd.s32 %s405, 13
      %s736 = ssub.s32 24, %s735
      %v737 = vstv %s736
      %vm738 = vcmp.lt.s32.totalorder %v737, 0
      %v739 = vsel %vm738, %v18, %v733
      %v740 = vlaneseq
      %v741 = vand.u32 %v740, 127
      %vm743 = vcmp.lt.s32.totalorder %v741, 72
      %v744 = vsel %vm743, %v739, %v18
      %s745 = scalar_lea.vmem [#allocation7], 52
      %v746 = vpack.c.bf16 0.0, %v744
      %748 = vst [vmem:[%s745] sm:$0xf] %v746
      %v750 = vld [vmem:[#allocation7] sm:$0xf]
      %v751 = vld [vmem:[#allocation7 + $0x4] sm:$0xf]
      %v752 = vld [vmem:[#allocation7 + $0x8] sm:$0xf]
      %v753 = vld [vmem:[#allocation7 + $0xc] sm:$0xf]
      %v754 = vld [vmem:[#allocation7 + $0x10] sm:$0xf]
      %v755 = vld [vmem:[#allocation7 + $0x14] sm:$0xf]
      %v756 = vld [vmem:[#allocation7 + $0x18] sm:$0xf]
      %v757 = vld [vmem:[#allocation7 + $0x1c] sm:$0xf]
      %v758 = vld [vmem:[#allocation7 + $0x20] sm:$0xf]
      %v759 = vld [vmem:[#allocation7 + $0x24] sm:$0xf]
      %v760 = vld [vmem:[#allocation7 + $0x28] sm:$0xf]
      %v761 = vld [vmem:[#allocation7 + $0x2c] sm:$0xf]
      %v762 = vld [vmem:[#allocation7 + $0x30] sm:$0xf]
      %v763 = vld [vmem:[#allocation7 + $0x34] sm:$0xf]
      %v764 = vld [vmem:[%s0] sm:$0xf]
      %v765 = vld [vmem:[%s0 + $0x4] sm:$0xf]
      %v766 = vld [vmem:[%s0 + $0x8] sm:$0xf]
      %v767 = vld [vmem:[%s0 + $0xc] sm:$0xf]
      %v768 = vld [vmem:[%s0 + $0x10] sm:$0xf]
      %v769 = vld [vmem:[%s0 + $0x14] sm:$0xf]
      %v770 = vld [vmem:[%s0 + $0x18] sm:$0xf]
      %v771 = vld [vmem:[%s0 + $0x1c] sm:$0xf]
      %v772 = vld [vmem:[%s0 + $0x20] sm:$0xf]
      %v773 = vld [vmem:[%s0 + $0x24] sm:$0xf]
      %v774 = vld [vmem:[%s0 + $0x28] sm:$0xf]
      %v775 = vld [vmem:[%s0 + $0x2c] sm:$0xf]
      %v776 = vld [vmem:[%s0 + $0x30] sm:$0xf]
      %v777 = vld [vmem:[%s0 + $0x34] sm:$0xf]
      %v778 = vld [vmem:[%s0 + $0x38] sm:$0xf]
      %v779 = vld [vmem:[%s0 + $0x3c] sm:$0xf]
      %v780 = vld [vmem:[%s1] sm:$0x1]
      %v782 = vlaneseq
      %v783 = vshrl.u32 %v782, 7
      %v784 = vsub.s32 0, %v783
      %v785 = vrot.slane %v780, %v784
      %v801 = vunpack.c.l.b16 %v750
      %v802 = vunpack.c.l.b16 %v751
      %v803 = vunpack.c.l.b16 %v752
      %v804 = vunpack.c.l.b16 %v753
      %v805 = vunpack.c.l.b16 %v754
      %v806 = vunpack.c.l.b16 %v755
      %v807 = vunpack.c.l.b16 %v756
      %v808 = vunpack.c.l.b16 %v757
      %v809 = vunpack.c.l.b16 %v758
      %v810 = vunpack.c.l.b16 %v759
      %v811 = vunpack.c.l.b16 %v760
      %v812 = vunpack.c.l.b16 %v761
      %v813 = vunpack.c.l.b16 %v762
      %v814 = vunpack.c.l.b16 %v763
      %v815 = vpack.c.b16 %v802, %v801
      %v816 = vpack.c.b16 %v804, %v803
      %v817 = vpack.c.b16 %v806, %v805
      %v818 = vpack.c.b16 %v808, %v807
      %v819 = vpack.c.b16 %v810, %v809
      %v820 = vpack.c.b16 %v812, %v811
      %v821 = vpack.c.b16 %v814, %v813
      %v845 = vunpack.c.l.b16 %v764
      %v846 = vunpack.c.l.b16 %v765
      %v847 = vunpack.c.l.b16 %v766
      %v848 = vunpack.c.l.b16 %v767
      %v849 = vunpack.c.l.b16 %v768
      %v850 = vunpack.c.l.b16 %v769
      %v851 = vunpack.c.l.b16 %v770
      %v852 = vunpack.c.l.b16 %v771
      %v853 = vunpack.c.l.b16 %v772
      %v854 = vunpack.c.l.b16 %v773
      %v855 = vunpack.c.l.b16 %v774
      %v856 = vunpack.c.l.b16 %v775
      %v857 = vunpack.c.l.b16 %v776
      %v858 = vunpack.c.l.b16 %v777
      %v859 = vunpack.c.l.b16 %v778
      %v860 = vunpack.c.l.b16 %v779
      %v861 = vpack.c.b16 %v846, %v845
      %v862 = vpack.c.b16 %v848, %v847
      %v863 = vpack.c.b16 %v850, %v849
      %v864 = vpack.c.b16 %v852, %v851
      %v865 = vpack.c.b16 %v854, %v853
      %v866 = vpack.c.b16 %v856, %v855
      %v867 = vpack.c.b16 %v858, %v857
      %v868 = vpack.c.b16 %v860, %v859
      %877 = vmatprep.subr.bf16.mxu0 0
      %878 = vmatpush1.bf16.msra.mxu0 %v861
      %879 = vmatprep.subr.bf16.mxu0 0
      %880 = vmatpush1.bf16.msra.mxu0 %v862
      %881 = vmatprep.subr.bf16.mxu0 0
      %882 = vmatpush1.bf16.msra.mxu0 %v863
      %883 = vmatprep.subr.bf16.mxu0 0
      %884 = vmatpush1.bf16.msra.mxu0 %v864
      %885 = vmatprep.subr.bf16.mxu0 0
      %886 = vmatpush1.bf16.msra.mxu0 %v865
      %887 = vmatprep.subr.bf16.mxu0 0
      %888 = vmatpush1.bf16.msra.mxu0 %v866
      %889 = vmatprep.subr.bf16.mxu0 0
      %890 = vmatpush1.bf16.msra.mxu0 %v867
      %891 = vmatprep.subr.bf16.mxu0 0
      %892 = vmatpush1.bf16.msra.mxu0 %v868
      %893 = vmatprep.subr.bf16.mxu0 0
      %894 = vmatpush1.bf16.msra.mxu0 0
      %895 = vmatprep.subr.bf16.mxu0 0
      %896 = vmatpush1.bf16.msra.mxu0 0
      %897 = vmatprep.subr.bf16.mxu0 0
      %898 = vmatpush1.bf16.msra.mxu0 0
      %899 = vmatprep.subr.bf16.mxu0 0
      %900 = vmatpush1.bf16.msra.mxu0 0
      %901 = vmatprep.subr.bf16.mxu0 0
      %902 = vmatpush1.bf16.msra.mxu0 0
      %903 = vmatprep.subr.bf16.mxu0 0
      %904 = vmatpush1.bf16.msra.mxu0 0
      %905 = vmatprep.subr.bf16.mxu0 0
      %906 = vmatpush1.bf16.msra.mxu0 0
      %907 = vmatprep.subr.bf16.mxu0 0
      %908 = vmatpush1.bf16.msra.mxu0 0
      %909 = vmatprep.mubr.bf16.mxu0 0
      %910 = vmatmul.mubr.bf16.gmra.mrb[0].mxu0 %v815
      %v911 = vpop.f32.mrb[0].mxu0
      %v912 = vadd.f32 %v785, %v911
      %v913 = vpop.f32.mrb[0].mxu0
      %v914 = vpop.f32.mrb[0].mxu0
      %v915 = vadd.f32 %v785, %v914
      %v916 = vpop.f32.mrb[0].mxu0
      %917 = vmatprep.mubr.bf16.mxu0 0
      %918 = vmatmul.mubr.bf16.gmra.mrb[0].mxu0 %v816
      %v919 = vpop.f32.mrb[0].mxu0
      %v920 = vadd.f32 %v785, %v919
      %v921 = vpop.f32.mrb[0].mxu0
      %v922 = vpop.f32.mrb[0].mxu0
      %v923 = vadd.f32 %v785, %v922
      %v924 = vpop.f32.mrb[0].mxu0
      %925 = vmatprep.mubr.bf16.mxu0 0
      %926 = vmatmul.mubr.bf16.gmra.mrb[0].mxu0 %v817
      %v927 = vpop.f32.mrb[0].mxu0
      %v928 = vadd.f32 %v785, %v927
      %v929 = vpop.f32.mrb[0].mxu0
      %v930 = vpop.f32.mrb[0].mxu0
      %v931 = vadd.f32 %v785, %v930
      %v932 = vpop.f32.mrb[0].mxu0
      %933 = vmatprep.mubr.bf16.mxu0 0
      %934 = vmatmul.mubr.bf16.gmra.mrb[0].mxu0 %v818
      %v935 = vpop.f32.mrb[0].mxu0
      %v936 = vadd.f32 %v785, %v935
      %v937 = vpop.f32.mrb[0].mxu0
      %v938 = vpop.f32.mrb[0].mxu0
      %v939 = vadd.f32 %v785, %v938
      %v940 = vpop.f32.mrb[0].mxu0
      %941 = vmatprep.mubr.bf16.mxu0 0
      %942 = vmatmul.mubr.bf16.gmra.mrb[0].mxu0 %v819
      %v943 = vpop.f32.mrb[0].mxu0
      %v944 = vadd.f32 %v785, %v943
      %v945 = vpop.f32.mrb[0].mxu0
      %v946 = vpop.f32.mrb[0].mxu0
      %v947 = vadd.f32 %v785, %v946
      %v948 = vpop.f32.mrb[0].mxu0
      %949 = vmatprep.mubr.bf16.mxu0 0
      %950 = vmatmul.mubr.bf16.gmra.mrb[0].mxu0 %v820
      %v951 = vpop.f32.mrb[0].mxu0
      %v952 = vadd.f32 %v785, %v951
      %v953 = vpop.f32.mrb[0].mxu0
      %v954 = vpop.f32.mrb[0].mxu0
      %v955 = vadd.f32 %v785, %v954
      %v956 = vpop.f32.mrb[0].mxu0
      %957 = vmatprep.mubr.bf16.mxu0 0
      %958 = vmatmul.mubr.bf16.gmra.mrb[0].mxu0 %v821
      %v959 = vpop.f32.mrb[0].mxu0
      %v960 = vadd.f32 %v785, %v959
      %v961 = vpop.f32.mrb[0].mxu0
      %v962 = vpop.f32.mrb[0].mxu0
      %v963 = vadd.f32 %v785, %v962
      %v964 = vpop.f32.mrb[0].mxu0
      %965 = vdwg.mxu0
      %v966 = vmax.f32 %v912, 0.0
      %v967 = vmax.f32 %v915, 0.0
      %v968 = vmax.f32 %v920, 0.0
      %v969 = vmax.f32 %v923, 0.0
      %v970 = vmax.f32 %v928, 0.0
      %v971 = vmax.f32 %v931, 0.0
      %v972 = vmax.f32 %v936, 0.0
      %v973 = vmax.f32 %v939, 0.0
      %v974 = vmax.f32 %v944, 0.0
      %v975 = vmax.f32 %v947, 0.0
      %v976 = vmax.f32 %v952, 0.0
      %v977 = vmax.f32 %v955, 0.0
      %v978 = vmax.f32 %v960, 0.0
      %v979 = vmax.f32 %v963, 0.0
      %v980 = vpack.c.bf16 %v967, %v966
      %v981 = vpack.c.bf16 %v969, %v968
      %v982 = vpack.c.bf16 %v971, %v970
      %v983 = vpack.c.bf16 %v973, %v972
      %v984 = vpack.c.bf16 %v975, %v974
      %v985 = vpack.c.bf16 %v977, %v976
      %v986 = vpack.c.bf16 %v979, %v978
      %v987 = vld [vmem:[%s2] sm:$0xf]
      %v988 = vld [vmem:[%s2 + $0x4] sm:$0xf]
      %v989 = vld [vmem:[%s2 + $0x8] sm:$0xf]
      %v990 = vld [vmem:[%s2 + $0xc] sm:$0xf]
      %v991 = vld [vmem:[%s2 + $0x10] sm:$0xf]
      %v992 = vld [vmem:[%s2 + $0x14] sm:$0xf]
      %v993 = vld [vmem:[%s2 + $0x18] sm:$0xf]
      %v994 = vld [vmem:[%s2 + $0x1c] sm:$0xf]
      %v995 = vld [vmem:[%s2 + $0x20] sm:$0xf]
      %v996 = vld [vmem:[%s2 + $0x24] sm:$0xf]
      %v997 = vld [vmem:[%s2 + $0x28] sm:$0xf]
      %v998 = vld [vmem:[%s2 + $0x2c] sm:$0xf]
      %v999 = vld [vmem:[%s2 + $0x30] sm:$0xf]
      %v1000 = vld [vmem:[%s2 + $0x34] sm:$0xf]
      %v1001 = vld [vmem:[%s2 + $0x38] sm:$0xf]
      %v1002 = vld [vmem:[%s2 + $0x3c] sm:$0xf]
      %v1003 = vld [vmem:[%s3] sm:$0x1]
      %v1005 = vlaneseq
      %v1006 = vshrl.u32 %v1005, 7
      %v1007 = vsub.s32 0, %v1006
      %v1008 = vrot.slane %v1003, %v1007
      %v1026 = vunpack.c.l.b16 %v987
      %v1027 = vunpack.c.l.b16 %v988
      %v1028 = vunpack.c.l.b16 %v989
      %v1029 = vunpack.c.l.b16 %v990
      %v1030 = vunpack.c.l.b16 %v991
      %v1031 = vunpack.c.l.b16 %v992
      %v1032 = vunpack.c.l.b16 %v993
      %v1033 = vunpack.c.l.b16 %v994
      %v1034 = vunpack.c.l.b16 %v995
      %v1035 = vunpack.c.l.b16 %v996
      %v1036 = vunpack.c.l.b16 %v997
      %v1037 = vunpack.c.l.b16 %v998
      %v1038 = vunpack.c.l.b16 %v999
      %v1039 = vunpack.c.l.b16 %v1000
      %v1040 = vunpack.c.l.b16 %v1001
      %v1041 = vunpack.c.l.b16 %v1002
      %v1042 = vpack.c.b16 %v1027, %v1026
      %v1043 = vpack.c.b16 %v1029, %v1028
      %v1044 = vpack.c.b16 %v1031, %v1030
      %v1045 = vpack.c.b16 %v1033, %v1032
      %v1046 = vpack.c.b16 %v1035, %v1034
      %v1047 = vpack.c.b16 %v1037, %v1036
      %v1048 = vpack.c.b16 %v1039, %v1038
      %v1049 = vpack.c.b16 %v1041, %v1040
      %1058 = vmatprep.subr.bf16.mxu0 0
      %1059 = vmatpush1.bf16.msra.mxu0 %v1042
      %1060 = vmatprep.subr.bf16.mxu0 0
      %1061 = vmatpush1.bf16.msra.mxu0 %v1043
      %1062 = vmatprep.subr.bf16.mxu0 0
      %1063 = vmatpush1.bf16.msra.mxu0 %v1044
      %1064 = vmatprep.subr.bf16.mxu0 0
      %1065 = vmatpush1.bf16.msra.mxu0 %v1045
      %1066 = vmatprep.subr.bf16.mxu0 0
      %1067 = vmatpush1.bf16.msra.mxu0 %v1046
      %1068 = vmatprep.subr.bf16.mxu0 0
      %1069 = vmatpush1.bf16.msra.mxu0 %v1047
      %1070 = vmatprep.subr.bf16.mxu0 0
      %1071 = vmatpush1.bf16.msra.mxu0 %v1048
      %1072 = vmatprep.subr.bf16.mxu0 0
      %1073 = vmatpush1.bf16.msra.mxu0 %v1049
      %1074 = vmatprep.subr.bf16.mxu0 0
      %1075 = vmatpush1.bf16.msra.mxu0 0
      %1076 = vmatprep.subr.bf16.mxu0 0
      %1077 = vmatpush1.bf16.msra.mxu0 0
      %1078 = vmatprep.subr.bf16.mxu0 0
      %1079 = vmatpush1.bf16.msra.mxu0 0
      %1080 = vmatprep.subr.bf16.mxu0 0
      %1081 = vmatpush1.bf16.msra.mxu0 0
      %1082 = vmatprep.subr.bf16.mxu0 0
      %1083 = vmatpush1.bf16.msra.mxu0 0
      %1084 = vmatprep.subr.bf16.mxu0 0
      %1085 = vmatpush1.bf16.msra.mxu0 0
      %1086 = vmatprep.subr.bf16.mxu0 0
      %1087 = vmatpush1.bf16.msra.mxu0 0
      %1088 = vmatprep.subr.bf16.mxu0 0
      %1089 = vmatpush1.bf16.msra.mxu0 0
      %1090 = vmatprep.mubr.bf16.mxu0 0
      %1091 = vmatmul.mubr.bf16.gmra.mrb[0].mxu0 %v980
      %v1092 = vpop.f32.mrb[0].mxu0
      %v1093 = vadd.f32 %v1008, %v1092
      %v1094 = vpop.f32.mrb[0].mxu0
      %v1095 = vpop.f32.mrb[0].mxu0
      %v1096 = vadd.f32 %v1008, %v1095
      %v1097 = vpop.f32.mrb[0].mxu0
      %1098 = vmatprep.mubr.bf16.mxu0 0
      %1099 = vmatmul.mubr.bf16.gmra.mrb[0].mxu0 %v981
      %v1100 = vpop.f32.mrb[0].mxu0
      %v1101 = vadd.f32 %v1008, %v1100
      %v1102 = vpop.f32.mrb[0].mxu0
      %v1103 = vpop.f32.mrb[0].mxu0
      %v1104 = vadd.f32 %v1008, %v1103
      %v1105 = vpop.f32.mrb[0].mxu0
      %1106 = vmatprep.mubr.bf16.mxu0 0
      %1107 = vmatmul.mubr.bf16.gmra.mrb[0].mxu0 %v982
      %v1108 = vpop.f32.mrb[0].mxu0
      %v1109 = vadd.f32 %v1008, %v1108
      %v1110 = vpop.f32.mrb[0].mxu0
      %v1111 = vpop.f32.mrb[0].mxu0
      %v1112 = vadd.f32 %v1008, %v1111
      %v1113 = vpop.f32.mrb[0].mxu0
      %1114 = vmatprep.mubr.bf16.mxu0 0
      %1115 = vmatmul.mubr.bf16.gmra.mrb[0].mxu0 %v983
      %v1116 = vpop.f32.mrb[0].mxu0
      %v1117 = vadd.f32 %v1008, %v1116
      %v1118 = vpop.f32.mrb[0].mxu0
      %v1119 = vpop.f32.mrb[0].mxu0
      %v1120 = vadd.f32 %v1008, %v1119
      %v1121 = vpop.f32.mrb[0].mxu0
      %1122 = vmatprep.mubr.bf16.mxu0 0
      %1123 = vmatmul.mubr.bf16.gmra.mrb[0].mxu0 %v984
      %v1124 = vpop.f32.mrb[0].mxu0
      %v1125 = vadd.f32 %v1008, %v1124
      %v1126 = vpop.f32.mrb[0].mxu0
      %v1127 = vpop.f32.mrb[0].mxu0
      %v1128 = vadd.f32 %v1008, %v1127
      %v1129 = vpop.f32.mrb[0].mxu0
      %1130 = vmatprep.mubr.bf16.mxu0 0
      %1131 = vmatmul.mubr.bf16.gmra.mrb[0].mxu0 %v985
      %v1132 = vpop.f32.mrb[0].mxu0
      %v1133 = vadd.f32 %v1008, %v1132
      %v1134 = vpop.f32.mrb[0].mxu0
      %v1135 = vpop.f32.mrb[0].mxu0
      %v1136 = vadd.f32 %v1008, %v1135
      %v1137 = vpop.f32.mrb[0].mxu0
      %1138 = vmatprep.mubr.bf16.mxu0 0
      %1139 = vmatmul.mubr.bf16.gmra.mrb[0].mxu0 %v986
      %v1140 = vpop.f32.mrb[0].mxu0
      %v1141 = vadd.f32 %v1008, %v1140
      %v1142 = vpop.f32.mrb[0].mxu0
      %v1143 = vpop.f32.mrb[0].mxu0
      %v1144 = vadd.f32 %v1008, %v1143
      %v1145 = vpop.f32.mrb[0].mxu0
      %1146 = vdwg.mxu0
      %v1147 = vmax.f32 %v1093, 0.0
      %v1148 = vmax.f32 %v1096, 0.0
      %v1149 = vmax.f32 %v1101, 0.0
      %v1150 = vmax.f32 %v1104, 0.0
      %v1151 = vmax.f32 %v1109, 0.0
      %v1152 = vmax.f32 %v1112, 0.0
      %v1153 = vmax.f32 %v1117, 0.0
      %v1154 = vmax.f32 %v1120, 0.0
      %v1155 = vmax.f32 %v1125, 0.0
      %v1156 = vmax.f32 %v1128, 0.0
      %v1157 = vmax.f32 %v1133, 0.0
      %v1158 = vmax.f32 %v1136, 0.0
      %v1159 = vmax.f32 %v1141, 0.0
      %v1160 = vmax.f32 %v1144, 0.0
      %v1161 = vpack.c.bf16 %v1148, %v1147
      %v1162 = vpack.c.bf16 %v1150, %v1149
      %v1163 = vpack.c.bf16 %v1152, %v1151
      %v1164 = vpack.c.bf16 %v1154, %v1153
      %v1165 = vpack.c.bf16 %v1156, %v1155
      %v1166 = vpack.c.bf16 %v1158, %v1157
      %v1167 = vpack.c.bf16 %v1160, %v1159
      %v1168 = vld [vmem:[%s4] sm:$0xf]
      %v1169 = vld [vmem:[%s4 + $0x4] sm:$0xf]
      %v1170 = vld [vmem:[%s4 + $0x8] sm:$0xf]
      %v1171 = vld [vmem:[%s4 + $0xc] sm:$0xf]
      %v1172 = vld [vmem:[%s4 + $0x10] sm:$0xf]
      %v1173 = vld [vmem:[%s4 + $0x14] sm:$0xf]
      %v1174 = vld [vmem:[%s4 + $0x18] sm:$0xf]
      %v1175 = vld [vmem:[%s4 + $0x1c] sm:$0xf]
      %v1176 = vld [vmem:[%s4 + $0x20] sm:$0xf]
      %v1177 = vld [vmem:[%s4 + $0x24] sm:$0xf]
      %v1178 = vld [vmem:[%s4 + $0x28] sm:$0xf]
      %v1179 = vld [vmem:[%s4 + $0x2c] sm:$0xf]
      %v1180 = vld [vmem:[%s4 + $0x30] sm:$0xf]
      %v1181 = vld [vmem:[%s4 + $0x34] sm:$0xf]
      %v1182 = vld [vmem:[%s4 + $0x38] sm:$0xf]
      %v1183 = vld [vmem:[%s4 + $0x3c] sm:$0xf]
      %v1184 = vld [vmem:[%s5] sm:$0x1]
      %v1186 = vlaneseq
      %v1187 = vshrl.u32 %v1186, 7
      %v1188 = vsub.s32 0, %v1187
      %v1189 = vrot.slane %v1184, %v1188
      %v1207 = vunpack.c.l.b16 %v1168
      %v1208 = vunpack.c.l.b16 %v1169
      %v1209 = vunpack.c.l.b16 %v1170
      %v1210 = vunpack.c.l.b16 %v1171
      %v1211 = vunpack.c.l.b16 %v1172
      %v1212 = vunpack.c.l.b16 %v1173
      %v1213 = vunpack.c.l.b16 %v1174
      %v1214 = vunpack.c.l.b16 %v1175
      %v1215 = vunpack.c.l.b16 %v1176
      %v1216 = vunpack.c.l.b16 %v1177
      %v1217 = vunpack.c.l.b16 %v1178
      %v1218 = vunpack.c.l.b16 %v1179
      %v1219 = vunpack.c.l.b16 %v1180
      %v1220 = vunpack.c.l.b16 %v1181
      %v1221 = vunpack.c.l.b16 %v1182
      %v1222 = vunpack.c.l.b16 %v1183
      %v1223 = vpack.c.b16 %v1208, %v1207
      %v1224 = vpack.c.b16 %v1210, %v1209
      %v1225 = vpack.c.b16 %v1212, %v1211
      %v1226 = vpack.c.b16 %v1214, %v1213
      %v1227 = vpack.c.b16 %v1216, %v1215
      %v1228 = vpack.c.b16 %v1218, %v1217
      %v1229 = vpack.c.b16 %v1220, %v1219
      %v1230 = vpack.c.b16 %v1222, %v1221
      %1239 = vmatprep.subr.bf16.mxu0 0
      %1240 = vmatpush1.bf16.msra.mxu0 %v1223
      %1241 = vmatprep.subr.bf16.mxu0 0
      %1242 = vmatpush1.bf16.msra.mxu0 %v1224
      %1243 = vmatprep.subr.bf16.mxu0 0
      %1244 = vmatpush1.bf16.msra.mxu0 %v1225
      %1245 = vmatprep.subr.bf16.mxu0 0
      %1246 = vmatpush1.bf16.msra.mxu0 %v1226
      %1247 = vmatprep.subr.bf16.mxu0 0
      %1248 = vmatpush1.bf16.msra.mxu0 %v1227
      %1249 = vmatprep.subr.bf16.mxu0 0
      %1250 = vmatpush1.bf16.msra.mxu0 %v1228
      %1251 = vmatprep.subr.bf16.mxu0 0
      %1252 = vmatpush1.bf16.msra.mxu0 %v1229
      %1253 = vmatprep.subr.bf16.mxu0 0
      %1254 = vmatpush1.bf16.msra.mxu0 %v1230
      %1255 = vmatprep.subr.bf16.mxu0 0
      %1256 = vmatpush1.bf16.msra.mxu0 0
      %1257 = vmatprep.subr.bf16.mxu0 0
      %1258 = vmatpush1.bf16.msra.mxu0 0
      %1259 = vmatprep.subr.bf16.mxu0 0
      %1260 = vmatpush1.bf16.msra.mxu0 0
      %1261 = vmatprep.subr.bf16.mxu0 0
      %1262 = vmatpush1.bf16.msra.mxu0 0
      %1263 = vmatprep.subr.bf16.mxu0 0
      %1264 = vmatpush1.bf16.msra.mxu0 0
      %1265 = vmatprep.subr.bf16.mxu0 0
      %1266 = vmatpush1.bf16.msra.mxu0 0
      %1267 = vmatprep.subr.bf16.mxu0 0
      %1268 = vmatpush1.bf16.msra.mxu0 0
      %1269 = vmatprep.subr.bf16.mxu0 0
      %1270 = vmatpush1.bf16.msra.mxu0 0
      %1271 = vmatprep.mubr.bf16.mxu0 0
      %1272 = vmatmul.mubr.bf16.gmra.mrb[0].mxu0 %v1161
      %v1273 = vpop.f32.mrb[0].mxu0
      %v1274 = vadd.f32 %v1189, %v1273
      %v1275 = vpop.f32.mrb[0].mxu0
      %v1276 = vpop.f32.mrb[0].mxu0
      %v1277 = vadd.f32 %v1189, %v1276
      %v1278 = vpop.f32.mrb[0].mxu0
      %1279 = vmatprep.mubr.bf16.mxu0 0
      %1280 = vmatmul.mubr.bf16.gmra.mrb[0].mxu0 %v1162
      %v1281 = vpop.f32.mrb[0].mxu0
      %v1282 = vadd.f32 %v1189, %v1281
      %v1283 = vpop.f32.mrb[0].mxu0
      %v1284 = vpop.f32.mrb[0].mxu0
      %v1285 = vadd.f32 %v1189, %v1284
      %v1286 = vpop.f32.mrb[0].mxu0
      %1287 = vmatprep.mubr.bf16.mxu0 0
      %1288 = vmatmul.mubr.bf16.gmra.mrb[0].mxu0 %v1163
      %v1289 = vpop.f32.mrb[0].mxu0
      %v1290 = vadd.f32 %v1189, %v1289
      %v1291 = vpop.f32.mrb[0].mxu0
      %v1292 = vpop.f32.mrb[0].mxu0
      %v1293 = vadd.f32 %v1189, %v1292
      %v1294 = vpop.f32.mrb[0].mxu0
      %1295 = vmatprep.mubr.bf16.mxu0 0
      %1296 = vmatmul.mubr.bf16.gmra.mrb[0].mxu0 %v1164
      %v1297 = vpop.f32.mrb[0].mxu0
      %v1298 = vadd.f32 %v1189, %v1297
      %v1299 = vpop.f32.mrb[0].mxu0
      %v1300 = vpop.f32.mrb[0].mxu0
      %v1301 = vadd.f32 %v1189, %v1300
      %v1302 = vpop.f32.mrb[0].mxu0
      %1303 = vmatprep.mubr.bf16.mxu0 0
      %1304 = vmatmul.mubr.bf16.gmra.mrb[0].mxu0 %v1165
      %v1305 = vpop.f32.mrb[0].mxu0
      %v1306 = vadd.f32 %v1189, %v1305
      %v1307 = vpop.f32.mrb[0].mxu0
      %v1308 = vpop.f32.mrb[0].mxu0
      %v1309 = vadd.f32 %v1189, %v1308
      %v1310 = vpop.f32.mrb[0].mxu0
      %1311 = vmatprep.mubr.bf16.mxu0 0
      %1312 = vmatmul.mubr.bf16.gmra.mrb[0].mxu0 %v1166
      %v1313 = vpop.f32.mrb[0].mxu0
      %v1314 = vadd.f32 %v1189, %v1313
      %v1315 = vpop.f32.mrb[0].mxu0
      %v1316 = vpop.f32.mrb[0].mxu0
      %v1317 = vadd.f32 %v1189, %v1316
      %v1318 = vpop.f32.mrb[0].mxu0
      %1319 = vmatprep.mubr.bf16.mxu0 0
      %1320 = vmatmul.mubr.bf16.gmra.mrb[0].mxu0 %v1167
      %v1321 = vpop.f32.mrb[0].mxu0
      %v1322 = vadd.f32 %v1189, %v1321
      %v1323 = vpop.f32.mrb[0].mxu0
      %v1324 = vpop.f32.mrb[0].mxu0
      %v1325 = vadd.f32 %v1189, %v1324
      %v1326 = vpop.f32.mrb[0].mxu0
      %1327 = vdwg.mxu0
      %v1328 = vmax.f32 %v1274, 0.0
      %v1329 = vmax.f32 %v1277, 0.0
      %v1330 = vmax.f32 %v1282, 0.0
      %v1331 = vmax.f32 %v1285, 0.0
      %v1332 = vmax.f32 %v1290, 0.0
      %v1333 = vmax.f32 %v1293, 0.0
      %v1334 = vmax.f32 %v1298, 0.0
      %v1335 = vmax.f32 %v1301, 0.0
      %v1336 = vmax.f32 %v1306, 0.0
      %v1337 = vmax.f32 %v1309, 0.0
      %v1338 = vmax.f32 %v1314, 0.0
      %v1339 = vmax.f32 %v1317, 0.0
      %v1340 = vmax.f32 %v1322, 0.0
      %v1341 = vmax.f32 %v1325, 0.0
      %v1342 = vpack.c.bf16 %v1329, %v1328
      %v1343 = vpack.c.bf16 %v1331, %v1330
      %v1344 = vpack.c.bf16 %v1333, %v1332
      %v1345 = vpack.c.bf16 %v1335, %v1334
      %v1346 = vpack.c.bf16 %v1337, %v1336
      %v1347 = vpack.c.bf16 %v1339, %v1338
      %v1348 = vpack.c.bf16 %v1341, %v1340
      %v1349 = vld [vmem:[%s6] sm:$0xf]
      %v1350 = vld [vmem:[%s6 + $0x4] sm:$0xf]
      %v1351 = vld [vmem:[%s6 + $0x8] sm:$0xf]
      %v1352 = vld [vmem:[%s6 + $0xc] sm:$0xf]
      %v1353 = vld [vmem:[%s6 + $0x10] sm:$0xf]
      %v1354 = vld [vmem:[%s6 + $0x14] sm:$0xf]
      %v1355 = vld [vmem:[%s6 + $0x18] sm:$0xf]
      %v1356 = vld [vmem:[%s6 + $0x1c] sm:$0xf]
      %v1357 = vld [vmem:[%s6 + $0x20] sm:$0xf]
      %v1358 = vld [vmem:[%s6 + $0x24] sm:$0xf]
      %v1359 = vld [vmem:[%s6 + $0x28] sm:$0xf]
      %v1360 = vld [vmem:[%s6 + $0x2c] sm:$0xf]
      %v1361 = vld [vmem:[%s6 + $0x30] sm:$0xf]
      %v1362 = vld [vmem:[%s6 + $0x34] sm:$0xf]
      %v1363 = vld [vmem:[%s6 + $0x38] sm:$0xf]
      %v1364 = vld [vmem:[%s6 + $0x3c] sm:$0xf]
      %v1365 = vld [vmem:[%s7] sm:$0x1]
      %v1367 = vlaneseq
      %v1368 = vshrl.u32 %v1367, 7
      %v1369 = vsub.s32 0, %v1368
      %v1370 = vrot.slane %v1365, %v1369
      %v1388 = vunpack.c.l.b16 %v1349
      %v1389 = vunpack.c.l.b16 %v1350
      %v1390 = vunpack.c.l.b16 %v1351
      %v1391 = vunpack.c.l.b16 %v1352
      %v1392 = vunpack.c.l.b16 %v1353
      %v1393 = vunpack.c.l.b16 %v1354
      %v1394 = vunpack.c.l.b16 %v1355
      %v1395 = vunpack.c.l.b16 %v1356
      %v1396 = vunpack.c.l.b16 %v1357
      %v1397 = vunpack.c.l.b16 %v1358
      %v1398 = vunpack.c.l.b16 %v1359
      %v1399 = vunpack.c.l.b16 %v1360
      %v1400 = vunpack.c.l.b16 %v1361
      %v1401 = vunpack.c.l.b16 %v1362
      %v1402 = vunpack.c.l.b16 %v1363
      %v1403 = vunpack.c.l.b16 %v1364
      %v1404 = vpack.c.b16 %v1389, %v1388
      %v1405 = vpack.c.b16 %v1391, %v1390
      %v1406 = vpack.c.b16 %v1393, %v1392
      %v1407 = vpack.c.b16 %v1395, %v1394
      %v1408 = vpack.c.b16 %v1397, %v1396
      %v1409 = vpack.c.b16 %v1399, %v1398
      %v1410 = vpack.c.b16 %v1401, %v1400
      %v1411 = vpack.c.b16 %v1403, %v1402
      %1420 = vmatprep.subr.bf16.mxu0 0
      %1421 = vmatpush1.bf16.msra.mxu0 %v1404
      %1422 = vmatprep.subr.bf16.mxu0 0
      %1423 = vmatpush1.bf16.msra.mxu0 %v1405
      %1424 = vmatprep.subr.bf16.mxu0 0
      %1425 = vmatpush1.bf16.msra.mxu0 %v1406
      %1426 = vmatprep.subr.bf16.mxu0 0
      %1427 = vmatpush1.bf16.msra.mxu0 %v1407
      %1428 = vmatprep.subr.bf16.mxu0 0
      %1429 = vmatpush1.bf16.msra.mxu0 %v1408
      %1430 = vmatprep.subr.bf16.mxu0 0
      %1431 = vmatpush1.bf16.msra.mxu0 %v1409
      %1432 = vmatprep.subr.bf16.mxu0 0
      %1433 = vmatpush1.bf16.msra.mxu0 %v1410
      %1434 = vmatprep.subr.bf16.mxu0 0
      %1435 = vmatpush1.bf16.msra.mxu0 %v1411
      %1436 = vmatprep.subr.bf16.mxu0 0
      %1437 = vmatpush1.bf16.msra.mxu0 0
      %1438 = vmatprep.subr.bf16.mxu0 0
      %1439 = vmatpush1.bf16.msra.mxu0 0
      %1440 = vmatprep.subr.bf16.mxu0 0
      %1441 = vmatpush1.bf16.msra.mxu0 0
      %1442 = vmatprep.subr.bf16.mxu0 0
      %1443 = vmatpush1.bf16.msra.mxu0 0
      %1444 = vmatprep.subr.bf16.mxu0 0
      %1445 = vmatpush1.bf16.msra.mxu0 0
      %1446 = vmatprep.subr.bf16.mxu0 0
      %1447 = vmatpush1.bf16.msra.mxu0 0
      %1448 = vmatprep.subr.bf16.mxu0 0
      %1449 = vmatpush1.bf16.msra.mxu0 0
      %1450 = vmatprep.subr.bf16.mxu0 0
      %1451 = vmatpush1.bf16.msra.mxu0 0
      %1452 = vmatprep.mubr.bf16.mxu0 0
      %1453 = vmatmul.mubr.bf16.gmra.mrb[0].mxu0 %v1342
      %v1454 = vpop.f32.mrb[0].mxu0
      %v1455 = vadd.f32 %v1370, %v1454
      %v1456 = vpop.f32.mrb[0].mxu0
      %v1457 = vpop.f32.mrb[0].mxu0
      %v1458 = vadd.f32 %v1370, %v1457
      %v1459 = vpop.f32.mrb[0].mxu0
      %1460 = vmatprep.mubr.bf16.mxu0 0
      %1461 = vmatmul.mubr.bf16.gmra.mrb[0].mxu0 %v1343
      %v1462 = vpop.f32.mrb[0].mxu0
      %v1463 = vadd.f32 %v1370, %v1462
      %v1464 = vpop.f32.mrb[0].mxu0
      %v1465 = vpop.f32.mrb[0].mxu0
      %v1466 = vadd.f32 %v1370, %v1465
      %v1467 = vpop.f32.mrb[0].mxu0
      %1468 = vmatprep.mubr.bf16.mxu0 0
      %1469 = vmatmul.mubr.bf16.gmra.mrb[0].mxu0 %v1344
      %v1470 = vpop.f32.mrb[0].mxu0
      %v1471 = vadd.f32 %v1370, %v1470
      %v1472 = vpop.f32.mrb[0].mxu0
      %v1473 = vpop.f32.mrb[0].mxu0
      %v1474 = vadd.f32 %v1370, %v1473
      %v1475 = vpop.f32.mrb[0].mxu0
      %1476 = vmatprep.mubr.bf16.mxu0 0
      %1477 = vmatmul.mubr.bf16.gmra.mrb[0].mxu0 %v1345
      %v1478 = vpop.f32.mrb[0].mxu0
      %v1479 = vadd.f32 %v1370, %v1478
      %v1480 = vpop.f32.mrb[0].mxu0
      %v1481 = vpop.f32.mrb[0].mxu0
      %v1482 = vadd.f32 %v1370, %v1481
      %v1483 = vpop.f32.mrb[0].mxu0
      %1484 = vmatprep.mubr.bf16.mxu0 0
      %1485 = vmatmul.mubr.bf16.gmra.mrb[0].mxu0 %v1346
      %v1486 = vpop.f32.mrb[0].mxu0
      %v1487 = vadd.f32 %v1370, %v1486
      %v1488 = vpop.f32.mrb[0].mxu0
      %v1489 = vpop.f32.mrb[0].mxu0
      %v1490 = vadd.f32 %v1370, %v1489
      %v1491 = vpop.f32.mrb[0].mxu0
      %1492 = vmatprep.mubr.bf16.mxu0 0
      %1493 = vmatmul.mubr.bf16.gmra.mrb[0].mxu0 %v1347
      %v1494 = vpop.f32.mrb[0].mxu0
      %v1495 = vadd.f32 %v1370, %v1494
      %v1496 = vpop.f32.mrb[0].mxu0
      %v1497 = vpop.f32.mrb[0].mxu0
      %v1498 = vadd.f32 %v1370, %v1497
      %v1499 = vpop.f32.mrb[0].mxu0
      %1500 = vmatprep.mubr.bf16.mxu0 0
      %1501 = vmatmul.mubr.bf16.gmra.mrb[0].mxu0 %v1348
      %v1502 = vpop.f32.mrb[0].mxu0
      %v1503 = vadd.f32 %v1370, %v1502
      %v1504 = vpop.f32.mrb[0].mxu0
      %v1505 = vpop.f32.mrb[0].mxu0
      %v1506 = vadd.f32 %v1370, %v1505
      %v1507 = vpop.f32.mrb[0].mxu0
      %1508 = vdwg.mxu0
      %v1509 = vmax.f32 %v1455, 0.0
      %v1510 = vmax.f32 %v1458, 0.0
      %v1511 = vmax.f32 %v1463, 0.0
      %v1512 = vmax.f32 %v1466, 0.0
      %v1513 = vmax.f32 %v1471, 0.0
      %v1514 = vmax.f32 %v1474, 0.0
      %v1515 = vmax.f32 %v1479, 0.0
      %v1516 = vmax.f32 %v1482, 0.0
      %v1517 = vmax.f32 %v1487, 0.0
      %v1518 = vmax.f32 %v1490, 0.0
      %v1519 = vmax.f32 %v1495, 0.0
      %v1520 = vmax.f32 %v1498, 0.0
      %v1521 = vmax.f32 %v1503, 0.0
      %v1522 = vmax.f32 %v1506, 0.0
      %v1523 = vpack.c.bf16 %v1510, %v1509
      %v1524 = vpack.c.bf16 %v1512, %v1511
      %v1525 = vpack.c.bf16 %v1514, %v1513
      %v1526 = vpack.c.bf16 %v1516, %v1515
      %v1527 = vpack.c.bf16 %v1518, %v1517
      %v1528 = vpack.c.bf16 %v1520, %v1519
      %v1529 = vpack.c.bf16 %v1522, %v1521
      %v1530 = vld [vmem:[%s8] sm:$0xf]
      %v1531 = vld [vmem:[%s8 + $0x4] sm:$0xf]
      %v1532 = vld [vmem:[%s8 + $0x8] sm:$0xf]
      %v1533 = vld [vmem:[%s8 + $0xc] sm:$0xf]
      %v1534 = vld [vmem:[%s8 + $0x10] sm:$0xf]
      %v1535 = vld [vmem:[%s8 + $0x14] sm:$0xf]
      %v1536 = vld [vmem:[%s8 + $0x18] sm:$0xf]
      %v1537 = vld [vmem:[%s8 + $0x1c] sm:$0xf]
      %v1538 = vld [vmem:[%s8 + $0x20] sm:$0xf]
      %v1539 = vld [vmem:[%s8 + $0x24] sm:$0xf]
      %v1540 = vld [vmem:[%s8 + $0x28] sm:$0xf]
      %v1541 = vld [vmem:[%s8 + $0x2c] sm:$0xf]
      %v1542 = vld [vmem:[%s8 + $0x30] sm:$0xf]
      %v1543 = vld [vmem:[%s8 + $0x34] sm:$0xf]
      %v1544 = vld [vmem:[%s8 + $0x38] sm:$0xf]
      %v1545 = vld [vmem:[%s8 + $0x3c] sm:$0xf]
      %v1546 = vld [vmem:[%s9] sm:$0x1]
      %v1548 = vlaneseq
      %v1549 = vshrl.u32 %v1548, 7
      %v1550 = vsub.s32 0, %v1549
      %v1551 = vrot.slane %v1546, %v1550
      %v1569 = vunpack.c.l.b16 %v1530
      %v1570 = vunpack.c.l.b16 %v1531
      %v1571 = vunpack.c.l.b16 %v1532
      %v1572 = vunpack.c.l.b16 %v1533
      %v1573 = vunpack.c.l.b16 %v1534
      %v1574 = vunpack.c.l.b16 %v1535
      %v1575 = vunpack.c.l.b16 %v1536
      %v1576 = vunpack.c.l.b16 %v1537
      %v1577 = vunpack.c.l.b16 %v1538
      %v1578 = vunpack.c.l.b16 %v1539
      %v1579 = vunpack.c.l.b16 %v1540
      %v1580 = vunpack.c.l.b16 %v1541
      %v1581 = vunpack.c.l.b16 %v1542
      %v1582 = vunpack.c.l.b16 %v1543
      %v1583 = vunpack.c.l.b16 %v1544
      %v1584 = vunpack.c.l.b16 %v1545
      %v1585 = vpack.c.b16 %v1570, %v1569
      %v1586 = vpack.c.b16 %v1572, %v1571
      %v1587 = vpack.c.b16 %v1574, %v1573
      %v1588 = vpack.c.b16 %v1576, %v1575
      %v1589 = vpack.c.b16 %v1578, %v1577
      %v1590 = vpack.c.b16 %v1580, %v1579
      %v1591 = vpack.c.b16 %v1582, %v1581
      %v1592 = vpack.c.b16 %v1584, %v1583
      %1601 = vmatprep.subr.bf16.mxu0 0
      %1602 = vmatpush1.bf16.msra.mxu0 %v1585
      %1603 = vmatprep.subr.bf16.mxu0 0
      %1604 = vmatpush1.bf16.msra.mxu0 %v1586
      %1605 = vmatprep.subr.bf16.mxu0 0
      %1606 = vmatpush1.bf16.msra.mxu0 %v1587
      %1607 = vmatprep.subr.bf16.mxu0 0
      %1608 = vmatpush1.bf16.msra.mxu0 %v1588
      %1609 = vmatprep.subr.bf16.mxu0 0
      %1610 = vmatpush1.bf16.msra.mxu0 %v1589
      %1611 = vmatprep.subr.bf16.mxu0 0
      %1612 = vmatpush1.bf16.msra.mxu0 %v1590
      %1613 = vmatprep.subr.bf16.mxu0 0
      %1614 = vmatpush1.bf16.msra.mxu0 %v1591
      %1615 = vmatprep.subr.bf16.mxu0 0
      %1616 = vmatpush1.bf16.msra.mxu0 %v1592
      %1617 = vmatprep.subr.bf16.mxu0 0
      %1618 = vmatpush1.bf16.msra.mxu0 0
      %1619 = vmatprep.subr.bf16.mxu0 0
      %1620 = vmatpush1.bf16.msra.mxu0 0
      %1621 = vmatprep.subr.bf16.mxu0 0
      %1622 = vmatpush1.bf16.msra.mxu0 0
      %1623 = vmatprep.subr.bf16.mxu0 0
      %1624 = vmatpush1.bf16.msra.mxu0 0
      %1625 = vmatprep.subr.bf16.mxu0 0
      %1626 = vmatpush1.bf16.msra.mxu0 0
      %1627 = vmatprep.subr.bf16.mxu0 0
      %1628 = vmatpush1.bf16.msra.mxu0 0
      %1629 = vmatprep.subr.bf16.mxu0 0
      %1630 = vmatpush1.bf16.msra.mxu0 0
      %1631 = vmatprep.subr.bf16.mxu0 0
      %1632 = vmatpush1.bf16.msra.mxu0 0
      %1633 = vmatprep.mubr.bf16.mxu0 0
      %1634 = vmatmul.mubr.bf16.gmra.mrb[0].mxu0 %v1523
      %v1635 = vpop.f32.mrb[0].mxu0
      %v1636 = vadd.f32 %v1551, %v1635
      %v1637 = vpop.f32.mrb[0].mxu0
      %v1638 = vpop.f32.mrb[0].mxu0
      %v1639 = vadd.f32 %v1551, %v1638
      %v1640 = vpop.f32.mrb[0].mxu0
      %1641 = vmatprep.mubr.bf16.mxu0 0
      %1642 = vmatmul.mubr.bf16.gmra.mrb[0].mxu0 %v1524
      %v1643 = vpop.f32.mrb[0].mxu0
      %v1644 = vadd.f32 %v1551, %v1643
      %v1645 = vpop.f32.mrb[0].mxu0
      %v1646 = vpop.f32.mrb[0].mxu0
      %v1647 = vadd.f32 %v1551, %v1646
      %v1648 = vpop.f32.mrb[0].mxu0
      %1649 = vmatprep.mubr.bf16.mxu0 0
      %1650 = vmatmul.mubr.bf16.gmra.mrb[0].mxu0 %v1525
      %v1651 = vpop.f32.mrb[0].mxu0
      %v1652 = vadd.f32 %v1551, %v1651
      %v1653 = vpop.f32.mrb[0].mxu0
      %v1654 = vpop.f32.mrb[0].mxu0
      %v1655 = vadd.f32 %v1551, %v1654
      %v1656 = vpop.f32.mrb[0].mxu0
      %1657 = vmatprep.mubr.bf16.mxu0 0
      %1658 = vmatmul.mubr.bf16.gmra.mrb[0].mxu0 %v1526
      %v1659 = vpop.f32.mrb[0].mxu0
      %v1660 = vadd.f32 %v1551, %v1659
      %v1661 = vpop.f32.mrb[0].mxu0
      %v1662 = vpop.f32.mrb[0].mxu0
      %v1663 = vadd.f32 %v1551, %v1662
      %v1664 = vpop.f32.mrb[0].mxu0
      %1665 = vmatprep.mubr.bf16.mxu0 0
      %1666 = vmatmul.mubr.bf16.gmra.mrb[0].mxu0 %v1527
      %v1667 = vpop.f32.mrb[0].mxu0
      %v1668 = vadd.f32 %v1551, %v1667
      %v1669 = vpop.f32.mrb[0].mxu0
      %v1670 = vpop.f32.mrb[0].mxu0
      %v1671 = vadd.f32 %v1551, %v1670
      %v1672 = vpop.f32.mrb[0].mxu0
      %1673 = vmatprep.mubr.bf16.mxu0 0
      %1674 = vmatmul.mubr.bf16.gmra.mrb[0].mxu0 %v1528
      %v1675 = vpop.f32.mrb[0].mxu0
      %v1676 = vadd.f32 %v1551, %v1675
      %v1677 = vpop.f32.mrb[0].mxu0
      %v1678 = vpop.f32.mrb[0].mxu0
      %v1679 = vadd.f32 %v1551, %v1678
      %v1680 = vpop.f32.mrb[0].mxu0
      %1681 = vmatprep.mubr.bf16.mxu0 0
      %1682 = vmatmul.mubr.bf16.gmra.mrb[0].mxu0 %v1529
      %v1683 = vpop.f32.mrb[0].mxu0
      %v1684 = vadd.f32 %v1551, %v1683
      %v1685 = vpop.f32.mrb[0].mxu0
      %v1686 = vpop.f32.mrb[0].mxu0
      %v1687 = vadd.f32 %v1551, %v1686
      %v1688 = vpop.f32.mrb[0].mxu0
      %1689 = vdwg.mxu0
      %v1690 = vpack.c.bf16 %v1639, %v1636
      %v1691 = vpack.c.bf16 %v1647, %v1644
      %v1692 = vpack.c.bf16 %v1655, %v1652
      %v1693 = vpack.c.bf16 %v1663, %v1660
      %v1694 = vpack.c.bf16 %v1671, %v1668
      %v1695 = vpack.c.bf16 %v1679, %v1676
      %v1696 = vpack.c.bf16 %v1687, %v1684
      %v1704 = vunpack.c.l.b16 %v1690
      %v1705 = vunpack.c.h.b16 %v1690
      %v1706 = vunpack.c.l.b16 %v1691
      %v1707 = vunpack.c.h.b16 %v1691
      %v1708 = vunpack.c.l.b16 %v1692
      %v1709 = vunpack.c.h.b16 %v1692
      %v1710 = vunpack.c.l.b16 %v1693
      %v1711 = vunpack.c.h.b16 %v1693
      %v1712 = vunpack.c.l.b16 %v1694
      %v1713 = vunpack.c.h.b16 %v1694
      %v1714 = vunpack.c.l.b16 %v1695
      %v1715 = vunpack.c.h.b16 %v1695
      %v1716 = vunpack.c.l.b16 %v1696
      %v1717 = vunpack.c.h.b16 %v1696
      %v1718 = vpack.c.b16 %v1704, %v1704
      %v1719 = vpack.c.b16 %v1705, %v1705
      %v1720 = vpack.c.b16 %v1706, %v1706
      %v1721 = vpack.c.b16 %v1707, %v1707
      %v1722 = vpack.c.b16 %v1708, %v1708
      %v1723 = vpack.c.b16 %v1709, %v1709
      %v1724 = vpack.c.b16 %v1710, %v1710
      %v1725 = vpack.c.b16 %v1711, %v1711
      %v1726 = vpack.c.b16 %v1712, %v1712
      %v1727 = vpack.c.b16 %v1713, %v1713
      %v1728 = vpack.c.b16 %v1714, %v1714
      %v1729 = vpack.c.b16 %v1715, %v1715
      %v1730 = vpack.c.b16 %v1716, %v1716
      %v1731 = vpack.c.b16 %v1717, %v1717
      %1746 = vst [vmem:[%s414] sm:$0xf] %v1718
      %1747 = vst [vmem:[%s414 + $0x4] sm:$0xf] %v1719
      %1748 = vst [vmem:[%s414 + $0x8] sm:$0xf] %v1720
      %1749 = vst [vmem:[%s414 + $0xc] sm:$0xf] %v1721
      %1750 = vst [vmem:[%s414 + $0x10] sm:$0xf] %v1722
      %1751 = vst [vmem:[%s414 + $0x14] sm:$0xf] %v1723
      %1752 = vst [vmem:[%s414 + $0x18] sm:$0xf] %v1724
      %1753 = vst [vmem:[%s414 + $0x1c] sm:$0xf] %v1725
      %1754 = vst [vmem:[%s414 + $0x20] sm:$0xf] %v1726
      %1755 = vst [vmem:[%s414 + $0x24] sm:$0xf] %v1727
      %1756 = vst [vmem:[%s414 + $0x28] sm:$0xf] %v1728
      %1757 = vst [vmem:[%s414 + $0x2c] sm:$0xf] %v1729
      %1758 = vst [vmem:[%s414 + $0x30] sm:$0xf] %v1730
      %1759 = vst [vmem:[%s414 + $0x34] sm:$0xf] %v1731
      %s1760 = smul.u32 14, %s28
      %p1761 = scmp.lt.s32.totalorder %s1760, 27
      %s1762 = scalar_select %p1761, %s1760, 27
      %s1763 = smul.addr %s1762, 4
      %s1764 = scalar_lea.vmem %s12, %s1763
      // Predicated region
      $region65: #{autoencoder_forward.2} parent=63 // pred_check
        %p1765 = pneg %p282
      $region66: #{autoencoder_forward.2} parent=63 // pred_check_branch
        %1767 = sbr.rel (%p1765) target = $region68
      $region67: #{autoencoder_forward.2} parent=63 // pred_region
        %s1768 = smul.u32 14, %s28
      $region68: #{autoencoder_forward.2} parent=63 // pred_fallthru
        _
    $region64: #{autoencoder_forward.2} parent=5 // pred_fallthru
      _
    %p1769 = scmp.le.s32.totalorder 2, %s23
    // Predicated region
    $region69: #{autoencoder_forward.2} parent=5 // pred_check
      %p1770 = pneg %p1769
    $region70: #{autoencoder_forward.2} parent=5 // pred_check_branch
      %1772 = sbr.rel (%p1770) target = $region72
    $region71: #{autoencoder_forward.2} parent=5 // pred_region
      %s1773 = ssub.s32 %s23, 2
      // Predicated region
      $region73: #{autoencoder_forward.2} parent=71 // pred_check
        %p1774 = pneg %p288
      $region74: #{autoencoder_forward.2} parent=71 // pred_check_branch
        %1776 = sbr.rel (%p1774) target = $region76
      $region75: #{autoencoder_forward.2} parent=71 // pred_region
        %s1777 = smul.u32 14, %s29
        %p1778 = scmp.lt.s32.totalorder %s1777, 27
        %s1779 = scalar_select %p1778, %s1777, 27
        %s1780 = smul.addr %s1779, 4
        %s1781 = scalar_lea.vmem %s12, %s1780
      $region76: #{autoencoder_forward.2} parent=71 // pred_fallthru
        _
    $region72: #{autoencoder_forward.2} parent=5 // pred_fallthru
      _
  $region6: #{autoencoder_forward.2} parent=0 // loop_footer
    %s27 = sadd.s32 1, %s23
  $region7: #{autoencoder_forward.2} parent=0 // loop_footer_branch
    %22 = sbr.rel target = $region3
  $region8: #{autoencoder_forward.2} parent=0 // loop_exit
    _

</llo_original>
